<compile_context>
chip_gen: v5e
topology: v5e:2x2
jax: 0.10.0
libtpu: 0.0.40
codegen_flags: <defaults>
</compile_context>

<pallas_src>
import functools

import jax
import jax.numpy as jnp
from jax.experimental import pallas as pl
from jax.experimental.pallas import tpu as pltpu  # noqa: F401  (TPU backend)

INPUT_DIM = 32
H1 = 512
H2 = 256
ACTION_DIM = 20
NUM_CATEGORIES = 4
OUT_DIM = ACTION_DIM * NUM_CATEGORIES   # 80
OUT_PAD = 128                           # lane-dense output slab width
VALUE_COL = OUT_DIM                     # column 80 holds the value
LN_EPS = 1e-5
LEAKY_SLOPE = 0.2

assert OUT_DIM < OUT_PAD


def _ln_leaky(h, g, b):
    """LayerNorm (biased var, eps inside rsqrt) followed by LeakyReLU(0.2)."""
    mu = jnp.mean(h, axis=-1, keepdims=True)
    var = jnp.maximum(jnp.mean(h * h, axis=-1, keepdims=True) - mu * mu, 0.0)
    hn = (h - mu) * jax.lax.rsqrt(var + LN_EPS) * g + b
    return jnp.where(hn > 0, hn, LEAKY_SLOPE * hn)


def manager_policy_kernel(x_ref, w1_ref, w2_ref, w3_ref, p1_ref, p2_ref, out_ref):
    # x  : [Bp, 32]        f32   (Bp padded to a multiple of 8)
    # w1 : [32, 2*H1]      bf16  (policy W1 || value W1, fused)
    # w2 : [2, H1, H2]     bf16  (stacked policy/value W2)
    # w3 : [H2, 128]       bf16  (policy W3, cols 80..127 zero-padded)
    # p1 : [3, 2*H1]       f32   rows: b1cat, gamma1cat, beta1cat
    # p2 : [8, H2]         f32   rows: pb2, pg2, pbe2, vb2, vg2, vbe2, vw3, b3row
    #                            (b3row: cols 0..79 = pb3, col 80 = vb3, rest 0)
    # out: [Bp, 128]       f32   cols 0..79 logits, col 80 value
    x = x_ref[...].astype(jnp.bfloat16)
    p1 = p1_ref[...]
    p2 = p2_ref[...]

    # ---- fused layer 1 (both heads, one MXU pass) ------------------------------
    h1 = jnp.dot(x, w1_ref[...], preferred_element_type=jnp.float32) + p1[0:1, :]
    hp = _ln_leaky(h1[:, :H1], p1[1:2, :H1], p1[2:3, :H1])
    hv = _ln_leaky(h1[:, H1:], p1[1:2, H1:], p1[2:3, H1:])
    # TODO(synk): nn.Dropout after this activation is identity in eval mode.

    # ---- layer 2 per head -------------------------------------------------------
    hp = _ln_leaky(
        jnp.dot(hp.astype(jnp.bfloat16), w2_ref[0],
                preferred_element_type=jnp.float32) + p2[0:1, :],
        p2[1:2, :], p2[2:3, :])
    hv = _ln_leaky(
        jnp.dot(hv.astype(jnp.bfloat16), w2_ref[1],
                preferred_element_type=jnp.float32) + p2[3:4, :],
        p2[4:5, :], p2[5:6, :])

    # ---- heads ------------------------------------------------------------------
    # Policy logits -> lane-dense [Bp, 128] slab (bias row already contains vb3 at col 80).
    slab = jnp.dot(hp.astype(jnp.bfloat16), w3_ref[...],
                   preferred_element_type=jnp.float32) + p2[7:8, :OUT_PAD]
    # Value head final layer as VPU multiply + lane reduction (N=1 would waste the MXU).
    val = jnp.sum(hv * p2[6:7, :], axis=-1, keepdims=True)          # [Bp, 1]
    col = jax.lax.broadcasted_iota(jnp.int32, slab.shape, 1)
    out_ref[...] = slab + jnp.where(col == VALUE_COL, val, 0.0)


@functools.partial(jax.jit, static_argnames=("action_dim", "num_categories"))
def manager_policy_forward(state, packed, *, action_dim=ACTION_DIM,
                           num_categories=NUM_CATEGORIES):
    """state: [B, D] f32 -> (logits [B, action_dim, num_categories], value [B])."""
    b = state.shape[0]
    bp = ((b + 7) // 8) * 8                     # pad batch to the f32 sublane tile
    x = state.astype(jnp.float32)
    if bp != b:
        x = jnp.pad(x, ((0, bp - b), (0, 0)))

    out = pl.pallas_call(
        manager_policy_kernel,
        out_shape=jax.ShapeDtypeStruct((bp, OUT_PAD), jnp.float32),
        # No grid: every operand is one full-array VMEM block (working set < 1 MiB).
    )(x, *packed)

    out_dim = action_dim * num_categories
    logits = out[:b, :out_dim].reshape(b, action_dim, num_categories)
    value = out[:b, VALUE_COL]
    return logits, value


def init_params(key, input_dim=INPUT_DIM):
    """Torch-like init: Linear uniform +-1/sqrt(fan_in) (weights stored [in, out]),
    LayerNorm gamma=1 / beta=0. Returned in f32; packing casts big mats to bf16."""
    def linear(k, fan_in, fan_out):
        kw, kb = jax.random.split(k)
        bound = 1.0 / jnp.sqrt(fan_in)
        w = jax.random.uniform(kw, (fan_in, fan_out), jnp.float32, -bound, bound)
        bias = jax.random.uniform(kb, (fan_out,), jnp.float32, -bound, bound)
        return w, bias

    def ln(n):
        return jnp.ones((n,), jnp.float32), jnp.zeros((n,), jnp.float32)

    keys = jax.random.split(key, 6)
    pw1, pb1 = linear(keys[0], input_dim, H1); pg1, pbe1 = ln(H1)
    pw2, pb2 = linear(keys[1], H1, H2);        pg2, pbe2 = ln(H2)
    pw3, pb3 = linear(keys[2], H2, OUT_DIM)
    vw1, vb1 = linear(keys[3], input_dim, H1); vg1, vbe1 = ln(H1)
    vw2, vb2 = linear(keys[4], H1, H2);        vg2, vbe2 = ln(H2)
    vw3, vb3 = linear(keys[5], H2, 1)
    return (pw1, pb1, pg1, pbe1, pw2, pb2, pg2, pbe2, pw3, pb3,
            vw1, vb1, vg1, vbe1, vw2, vb2, vg2, vbe2, vw3, vb3)


def pack_params(raw):
    """Pack 20 raw params into 6 kernel operands (bf16 weights, coalesced f32 slabs)."""
    (pw1, pb1, pg1, pbe1, pw2, pb2, pg2, pbe2, pw3, pb3,
     vw1, vb1, vg1, vbe1, vw2, vb2, vg2, vbe2, vw3, vb3) = raw

    w1cat = jnp.concatenate([pw1, vw1], axis=1).astype(jnp.bfloat16)        # [32, 1024]
    w2stk = jnp.stack([pw2, vw2], axis=0).astype(jnp.bfloat16)              # [2, 512, 256]
    w3pad = jnp.zeros((H2, OUT_PAD), jnp.float32).at[:, :OUT_DIM].set(pw3)
    w3pad = w3pad.astype(jnp.bfloat16)                                      # [256, 128]

    p1 = jnp.stack([jnp.concatenate([pb1, vb1]),
                    jnp.concatenate([pg1, vg1]),
                    jnp.concatenate([pbe1, vbe1])], axis=0)                 # [3, 1024] f32

    b3row = (jnp.zeros((H2,), jnp.float32)
             .at[:OUT_DIM].set(pb3)
             .at[VALUE_COL].set(vb3[0]))
    p2 = jnp.stack([pb2, pg2, pbe2, vb2, vg2, vbe2,
                    vw3.reshape(H2), b3row], axis=0)                        # [8, 256] f32
    return (w1cat, w2stk, w3pad, p1, p2)


def reference_forward(state, packed):
    """Pure-JAX reference doing the same math (bf16 weights, f32 accumulation)."""
    w1cat, w2stk, w3pad, p1, p2 = packed
    x = state.astype(jnp.bfloat16)
    h1 = jnp.dot(x, w1cat, preferred_element_type=jnp.float32) + p1[0]
    hp = _ln_leaky(h1[:, :H1], p1[1, :H1], p1[2, :H1])
    hv = _ln_leaky(h1[:, H1:], p1[1, H1:], p1[2, H1:])
    hp = _ln_leaky(jnp.dot(hp.astype(jnp.bfloat16), w2stk[0],
                           preferred_element_type=jnp.float32) + p2[0], p2[1], p2[2])
    hv = _ln_leaky(jnp.dot(hv.astype(jnp.bfloat16), w2stk[1],
                           preferred_element_type=jnp.float32) + p2[3], p2[4], p2[5])
    logits = (jnp.dot(hp.astype(jnp.bfloat16), w3pad,
                      preferred_element_type=jnp.float32) + p2[7, :OUT_PAD])[:, :OUT_DIM]
    value = jnp.sum(hv * p2[6], axis=-1) + p2[7, VALUE_COL]
    return logits.reshape(-1, ACTION_DIM, NUM_CATEGORIES), value


if __name__ == "__main__":
    key = jax.random.PRNGKey(0)
    key_p, key_x = jax.random.split(key)

    batch = 4
    raw = init_params(key_p, INPUT_DIM)
    packed = pack_params(raw)
    state = jax.random.normal(key_x, (batch, INPUT_DIM), jnp.float32)

    logits, value = manager_policy_forward(state, packed)
    jax.block_until_ready((logits, value))

    assert logits.shape == (batch, ACTION_DIM, NUM_CATEGORIES), logits.shape
    assert value.shape == (batch,), value.shape

    ref_logits, ref_value = reference_forward(state, packed)
    assert jnp.allclose(logits, ref_logits, atol=2e-3, rtol=2e-3)
    assert jnp.allclose(value, ref_value, atol=2e-3, rtol=2e-3)

    print("KERNEL_OK")
</pallas_src>

<mosaic_0001>
module attributes {stable_mosaic.version = 11 : i64} {
  func.func @manager_policy_kernel(%arg0: memref<8x32xf32, #tpu.memory_space<vmem>>, %arg1: memref<32x1024xbf16, #tpu.memory_space<vmem>>, %arg2: memref<2x512x256xbf16, #tpu.memory_space<vmem>>, %arg3: memref<256x128xbf16, #tpu.memory_space<vmem>>, %arg4: memref<3x1024xf32, #tpu.memory_space<vmem>>, %arg5: memref<8x256xf32, #tpu.memory_space<vmem>>, %arg6: memref<8x128xf32, #tpu.memory_space<vmem>>) attributes {dimension_semantics = [], scalar_prefetch = 0 : i64, scratch_operands = 0 : i64, tpu.core_type = #tpu.core_type<tc>} {
    %c0 = arith.constant 0 : index
    %c0_0 = arith.constant 0 : index
    %0 = vector.load %arg0[%c0, %c0_0] : memref<8x32xf32, #tpu.memory_space<vmem>>, vector<8x32xf32>
    %1 = arith.truncf %0 : vector<8x32xf32> to vector<8x32xbf16>
    %c0_1 = arith.constant 0 : index
    %c0_2 = arith.constant 0 : index
    %2 = vector.load %arg4[%c0_1, %c0_2] : memref<3x1024xf32, #tpu.memory_space<vmem>>, vector<3x1024xf32>
    %c0_3 = arith.constant 0 : index
    %c0_4 = arith.constant 0 : index
    %3 = vector.load %arg5[%c0_3, %c0_4] : memref<8x256xf32, #tpu.memory_space<vmem>>, vector<8x256xf32>
    %c0_5 = arith.constant 0 : index
    %c0_6 = arith.constant 0 : index
    %4 = vector.load %arg1[%c0_5, %c0_6] : memref<32x1024xbf16, #tpu.memory_space<vmem>>, vector<32x1024xbf16>
    %cst = arith.constant dense<0.000000e+00> : vector<8x1024xf32>
    %5 = tpu.matmul %1, %4, %cst {dimension_numbers = #tpu.dot_dimension_numbers<[1], [0], [0], [1], [0, 0, 1, 1], [], []>} : vector<8x32xbf16>, vector<32x1024xbf16>, vector<8x1024xf32> -> vector<8x1024xf32>
    %6 = vector.extract_strided_slice %2 {offsets = [0, 0], sizes = [1, 1024], strides = [1, 1]} : vector<3x1024xf32> to vector<1x1024xf32>
    %7 = vector.broadcast %6 : vector<1x1024xf32> to vector<8x1024xf32>
    %8 = arith.addf %5, %7 : vector<8x1024xf32>
    %9 = vector.extract_strided_slice %8 {offsets = [0, 0], sizes = [8, 512], strides = [1, 1]} : vector<8x1024xf32> to vector<8x512xf32>
    %10 = vector.extract_strided_slice %2 {offsets = [1, 0], sizes = [1, 512], strides = [1, 1]} : vector<3x1024xf32> to vector<1x512xf32>
    %11 = vector.extract_strided_slice %2 {offsets = [2, 0], sizes = [1, 512], strides = [1, 1]} : vector<3x1024xf32> to vector<1x512xf32>
    %cst_7 = arith.constant dense<0.000000e+00> : vector<8xf32>
    %12 = vector.multi_reduction <add>, %9, %cst_7 [1] : vector<8x512xf32> to vector<8xf32>
    %13 = vector.shape_cast %12 : vector<8xf32> to vector<8x1xf32>
    %cst_8 = arith.constant 5.120000e+02 : f32
    %14 = vector.broadcast %cst_8 : f32 to vector<8x1xf32>
    %15 = arith.divf %13, %14 : vector<8x1xf32>
    %16 = arith.mulf %9, %9 : vector<8x512xf32>
    %cst_9 = arith.constant dense<0.000000e+00> : vector<8xf32>
    %17 = vector.multi_reduction <add>, %16, %cst_9 [1] : vector<8x512xf32> to vector<8xf32>
    %18 = vector.shape_cast %17 : vector<8xf32> to vector<8x1xf32>
    %cst_10 = arith.constant 5.120000e+02 : f32
    %19 = vector.broadcast %cst_10 : f32 to vector<8x1xf32>
    %20 = arith.divf %18, %19 : vector<8x1xf32>
    %21 = arith.mulf %15, %15 : vector<8x1xf32>
    %22 = arith.subf %20, %21 : vector<8x1xf32>
    %cst_11 = arith.constant 0.000000e+00 : f32
    %23 = vector.broadcast %cst_11 : f32 to vector<8x1xf32>
    %24 = arith.maximumf %22, %23 : vector<8x1xf32>
    %25 = vector.broadcast %15 : vector<8x1xf32> to vector<8x512xf32>
    %26 = arith.subf %9, %25 : vector<8x512xf32>
    %cst_12 = arith.constant 9.99999974E-6 : f32
    %27 = vector.broadcast %cst_12 : f32 to vector<8x1xf32>
    %28 = arith.addf %24, %27 : vector<8x1xf32>
    %29 = math.rsqrt %28 : vector<8x1xf32>
    %30 = vector.broadcast %29 : vector<8x1xf32> to vector<8x512xf32>
    %31 = arith.mulf %26, %30 : vector<8x512xf32>
    %32 = vector.broadcast %10 : vector<1x512xf32> to vector<8x512xf32>
    %33 = arith.mulf %31, %32 : vector<8x512xf32>
    %34 = vector.broadcast %11 : vector<1x512xf32> to vector<8x512xf32>
    %35 = arith.addf %33, %34 : vector<8x512xf32>
    %cst_13 = arith.constant 0.000000e+00 : f32
    %36 = vector.broadcast %cst_13 : f32 to vector<8x512xf32>
    %37 = arith.cmpf ogt, %35, %36 : vector<8x512xf32>
    %cst_14 = arith.constant 2.000000e-01 : f32
    %38 = vector.broadcast %cst_14 : f32 to vector<8x512xf32>
    %39 = arith.mulf %38, %35 : vector<8x512xf32>
    %40 = arith.select %37, %35, %39 : vector<8x512xi1>, vector<8x512xf32>
    %41 = vector.extract_strided_slice %8 {offsets = [0, 512], sizes = [8, 512], strides = [1, 1]} : vector<8x1024xf32> to vector<8x512xf32>
    %42 = vector.extract_strided_slice %2 {offsets = [1, 512], sizes = [1, 512], strides = [1, 1]} : vector<3x1024xf32> to vector<1x512xf32>
    %43 = vector.extract_strided_slice %2 {offsets = [2, 512], sizes = [1, 512], strides = [1, 1]} : vector<3x1024xf32> to vector<1x512xf32>
    %cst_15 = arith.constant dense<0.000000e+00> : vector<8xf32>
    %44 = vector.multi_reduction <add>, %41, %cst_15 [1] : vector<8x512xf32> to vector<8xf32>
    %45 = vector.shape_cast %44 : vector<8xf32> to vector<8x1xf32>
    %cst_16 = arith.constant 5.120000e+02 : f32
    %46 = vector.broadcast %cst_16 : f32 to vector<8x1xf32>
    %47 = arith.divf %45, %46 : vector<8x1xf32>
    %48 = arith.mulf %41, %41 : vector<8x512xf32>
    %cst_17 = arith.constant dense<0.000000e+00> : vector<8xf32>
    %49 = vector.multi_reduction <add>, %48, %cst_17 [1] : vector<8x512xf32> to vector<8xf32>
    %50 = vector.shape_cast %49 : vector<8xf32> to vector<8x1xf32>
    %cst_18 = arith.constant 5.120000e+02 : f32
    %51 = vector.broadcast %cst_18 : f32 to vector<8x1xf32>
    %52 = arith.divf %50, %51 : vector<8x1xf32>
    %53 = arith.mulf %47, %47 : vector<8x1xf32>
    %54 = arith.subf %52, %53 : vector<8x1xf32>
    %cst_19 = arith.constant 0.000000e+00 : f32
    %55 = vector.broadcast %cst_19 : f32 to vector<8x1xf32>
    %56 = arith.maximumf %54, %55 : vector<8x1xf32>
    %57 = vector.broadcast %47 : vector<8x1xf32> to vector<8x512xf32>
    %58 = arith.subf %41, %57 : vector<8x512xf32>
    %cst_20 = arith.constant 9.99999974E-6 : f32
    %59 = vector.broadcast %cst_20 : f32 to vector<8x1xf32>
    %60 = arith.addf %56, %59 : vector<8x1xf32>
    %61 = math.rsqrt %60 : vector<8x1xf32>
    %62 = vector.broadcast %61 : vector<8x1xf32> to vector<8x512xf32>
    %63 = arith.mulf %58, %62 : vector<8x512xf32>
    %64 = vector.broadcast %42 : vector<1x512xf32> to vector<8x512xf32>
    %65 = arith.mulf %63, %64 : vector<8x512xf32>
    %66 = vector.broadcast %43 : vector<1x512xf32> to vector<8x512xf32>
    %67 = arith.addf %65, %66 : vector<8x512xf32>
    %cst_21 = arith.constant 0.000000e+00 : f32
    %68 = vector.broadcast %cst_21 : f32 to vector<8x512xf32>
    %69 = arith.cmpf ogt, %67, %68 : vector<8x512xf32>
    %cst_22 = arith.constant 2.000000e-01 : f32
    %70 = vector.broadcast %cst_22 : f32 to vector<8x512xf32>
    %71 = arith.mulf %70, %67 : vector<8x512xf32>
    %72 = arith.select %69, %67, %71 : vector<8x512xi1>, vector<8x512xf32>
    %73 = arith.truncf %40 : vector<8x512xf32> to vector<8x512xbf16>
    %c0_23 = arith.constant 0 : index
    %c0_24 = arith.constant 0 : index
    %c0_25 = arith.constant 0 : index
    %74 = vector.load %arg2[%c0_23, %c0_24, %c0_25] : memref<2x512x256xbf16, #tpu.memory_space<vmem>>, vector<1x512x256xbf16>
    %75 = vector.shape_cast %74 : vector<1x512x256xbf16> to vector<512x256xbf16>
    %cst_26 = arith.constant dense<0.000000e+00> : vector<8x256xf32>
    %76 = tpu.matmul %73, %75, %cst_26 {dimension_numbers = #tpu.dot_dimension_numbers<[1], [0], [0], [1], [0, 0, 1, 1], [], []>} : vector<8x512xbf16>, vector<512x256xbf16>, vector<8x256xf32> -> vector<8x256xf32>
    %77 = vector.extract_strided_slice %3 {offsets = [0, 0], sizes = [1, 256], strides = [1, 1]} : vector<8x256xf32> to vector<1x256xf32>
    %78 = vector.broadcast %77 : vector<1x256xf32> to vector<8x256xf32>
    %79 = arith.addf %76, %78 : vector<8x256xf32>
    %80 = vector.extract_strided_slice %3 {offsets = [1, 0], sizes = [1, 256], strides = [1, 1]} : vector<8x256xf32> to vector<1x256xf32>
    %81 = vector.extract_strided_slice %3 {offsets = [2, 0], sizes = [1, 256], strides = [1, 1]} : vector<8x256xf32> to vector<1x256xf32>
    %cst_27 = arith.constant dense<0.000000e+00> : vector<8xf32>
    %82 = vector.multi_reduction <add>, %79, %cst_27 [1] : vector<8x256xf32> to vector<8xf32>
    %83 = vector.shape_cast %82 : vector<8xf32> to vector<8x1xf32>
    %cst_28 = arith.constant 2.560000e+02 : f32
    %84 = vector.broadcast %cst_28 : f32 to vector<8x1xf32>
    %85 = arith.divf %83, %84 : vector<8x1xf32>
    %86 = arith.mulf %79, %79 : vector<8x256xf32>
    %cst_29 = arith.constant dense<0.000000e+00> : vector<8xf32>
    %87 = vector.multi_reduction <add>, %86, %cst_29 [1] : vector<8x256xf32> to vector<8xf32>
    %88 = vector.shape_cast %87 : vector<8xf32> to vector<8x1xf32>
    %cst_30 = arith.constant 2.560000e+02 : f32
    %89 = vector.broadcast %cst_30 : f32 to vector<8x1xf32>
    %90 = arith.divf %88, %89 : vector<8x1xf32>
    %91 = arith.mulf %85, %85 : vector<8x1xf32>
    %92 = arith.subf %90, %91 : vector<8x1xf32>
    %cst_31 = arith.constant 0.000000e+00 : f32
    %93 = vector.broadcast %cst_31 : f32 to vector<8x1xf32>
    %94 = arith.maximumf %92, %93 : vector<8x1xf32>
    %95 = vector.broadcast %85 : vector<8x1xf32> to vector<8x256xf32>
    %96 = arith.subf %79, %95 : vector<8x256xf32>
    %cst_32 = arith.constant 9.99999974E-6 : f32
    %97 = vector.broadcast %cst_32 : f32 to vector<8x1xf32>
    %98 = arith.addf %94, %97 : vector<8x1xf32>
    %99 = math.rsqrt %98 : vector<8x1xf32>
    %100 = vector.broadcast %99 : vector<8x1xf32> to vector<8x256xf32>
    %101 = arith.mulf %96, %100 : vector<8x256xf32>
    %102 = vector.broadcast %80 : vector<1x256xf32> to vector<8x256xf32>
    %103 = arith.mulf %101, %102 : vector<8x256xf32>
    %104 = vector.broadcast %81 : vector<1x256xf32> to vector<8x256xf32>
    %105 = arith.addf %103, %104 : vector<8x256xf32>
    %cst_33 = arith.constant 0.000000e+00 : f32
    %106 = vector.broadcast %cst_33 : f32 to vector<8x256xf32>
    %107 = arith.cmpf ogt, %105, %106 : vector<8x256xf32>
    %cst_34 = arith.constant 2.000000e-01 : f32
    %108 = vector.broadcast %cst_34 : f32 to vector<8x256xf32>
    %109 = arith.mulf %108, %105 : vector<8x256xf32>
    %110 = arith.select %107, %105, %109 : vector<8x256xi1>, vector<8x256xf32>
    %111 = arith.truncf %72 : vector<8x512xf32> to vector<8x512xbf16>
    %c1 = arith.constant 1 : index
    %c0_35 = arith.constant 0 : index
    %c0_36 = arith.constant 0 : index
    %112 = vector.load %arg2[%c1, %c0_35, %c0_36] : memref<2x512x256xbf16, #tpu.memory_space<vmem>>, vector<1x512x256xbf16>
    %113 = vector.shape_cast %112 : vector<1x512x256xbf16> to vector<512x256xbf16>
    %cst_37 = arith.constant dense<0.000000e+00> : vector<8x256xf32>
    %114 = tpu.matmul %111, %113, %cst_37 {dimension_numbers = #tpu.dot_dimension_numbers<[1], [0], [0], [1], [0, 0, 1, 1], [], []>} : vector<8x512xbf16>, vector<512x256xbf16>, vector<8x256xf32> -> vector<8x256xf32>
    %115 = vector.extract_strided_slice %3 {offsets = [3, 0], sizes = [1, 256], strides = [1, 1]} : vector<8x256xf32> to vector<1x256xf32>
    %116 = vector.broadcast %115 : vector<1x256xf32> to vector<8x256xf32>
    %117 = arith.addf %114, %116 : vector<8x256xf32>
    %118 = vector.extract_strided_slice %3 {offsets = [4, 0], sizes = [1, 256], strides = [1, 1]} : vector<8x256xf32> to vector<1x256xf32>
    %119 = vector.extract_strided_slice %3 {offsets = [5, 0], sizes = [1, 256], strides = [1, 1]} : vector<8x256xf32> to vector<1x256xf32>
    %cst_38 = arith.constant dense<0.000000e+00> : vector<8xf32>
    %120 = vector.multi_reduction <add>, %117, %cst_38 [1] : vector<8x256xf32> to vector<8xf32>
    %121 = vector.shape_cast %120 : vector<8xf32> to vector<8x1xf32>
    %cst_39 = arith.constant 2.560000e+02 : f32
    %122 = vector.broadcast %cst_39 : f32 to vector<8x1xf32>
    %123 = arith.divf %121, %122 : vector<8x1xf32>
    %124 = arith.mulf %117, %117 : vector<8x256xf32>
    %cst_40 = arith.constant dense<0.000000e+00> : vector<8xf32>
    %125 = vector.multi_reduction <add>, %124, %cst_40 [1] : vector<8x256xf32> to vector<8xf32>
    %126 = vector.shape_cast %125 : vector<8xf32> to vector<8x1xf32>
    %cst_41 = arith.constant 2.560000e+02 : f32
    %127 = vector.broadcast %cst_41 : f32 to vector<8x1xf32>
    %128 = arith.divf %126, %127 : vector<8x1xf32>
    %129 = arith.mulf %123, %123 : vector<8x1xf32>
    %130 = arith.subf %128, %129 : vector<8x1xf32>
    %cst_42 = arith.constant 0.000000e+00 : f32
    %131 = vector.broadcast %cst_42 : f32 to vector<8x1xf32>
    %132 = arith.maximumf %130, %131 : vector<8x1xf32>
    %133 = vector.broadcast %123 : vector<8x1xf32> to vector<8x256xf32>
    %134 = arith.subf %117, %133 : vector<8x256xf32>
    %cst_43 = arith.constant 9.99999974E-6 : f32
    %135 = vector.broadcast %cst_43 : f32 to vector<8x1xf32>
    %136 = arith.addf %132, %135 : vector<8x1xf32>
    %137 = math.rsqrt %136 : vector<8x1xf32>
    %138 = vector.broadcast %137 : vector<8x1xf32> to vector<8x256xf32>
    %139 = arith.mulf %134, %138 : vector<8x256xf32>
    %140 = vector.broadcast %118 : vector<1x256xf32> to vector<8x256xf32>
    %141 = arith.mulf %139, %140 : vector<8x256xf32>
    %142 = vector.broadcast %119 : vector<1x256xf32> to vector<8x256xf32>
    %143 = arith.addf %141, %142 : vector<8x256xf32>
    %cst_44 = arith.constant 0.000000e+00 : f32
    %144 = vector.broadcast %cst_44 : f32 to vector<8x256xf32>
    %145 = arith.cmpf ogt, %143, %144 : vector<8x256xf32>
    %cst_45 = arith.constant 2.000000e-01 : f32
    %146 = vector.broadcast %cst_45 : f32 to vector<8x256xf32>
    %147 = arith.mulf %146, %143 : vector<8x256xf32>
    %148 = arith.select %145, %143, %147 : vector<8x256xi1>, vector<8x256xf32>
    %149 = arith.truncf %110 : vector<8x256xf32> to vector<8x256xbf16>
    %c0_46 = arith.constant 0 : index
    %c0_47 = arith.constant 0 : index
    %150 = vector.load %arg3[%c0_46, %c0_47] : memref<256x128xbf16, #tpu.memory_space<vmem>>, vector<256x128xbf16>
    %cst_48 = arith.constant dense<0.000000e+00> : vector<8x128xf32>
    %151 = tpu.matmul %149, %150, %cst_48 {dimension_numbers = #tpu.dot_dimension_numbers<[1], [0], [0], [1], [0, 0, 1, 1], [], []>} : vector<8x256xbf16>, vector<256x128xbf16>, vector<8x128xf32> -> vector<8x128xf32>
    %152 = vector.extract_strided_slice %3 {offsets = [7, 0], sizes = [1, 128], strides = [1, 1]} : vector<8x256xf32> to vector<1x128xf32>
    %153 = vector.broadcast %152 : vector<1x128xf32> to vector<8x128xf32>
    %154 = arith.addf %151, %153 : vector<8x128xf32>
    %155 = vector.extract_strided_slice %3 {offsets = [6, 0], sizes = [1, 256], strides = [1, 1]} : vector<8x256xf32> to vector<1x256xf32>
    %156 = vector.broadcast %155 : vector<1x256xf32> to vector<8x256xf32>
    %157 = arith.mulf %148, %156 : vector<8x256xf32>
    %cst_49 = arith.constant dense<0.000000e+00> : vector<8xf32>
    %158 = vector.multi_reduction <add>, %157, %cst_49 [1] : vector<8x256xf32> to vector<8xf32>
    %159 = vector.shape_cast %158 : vector<8xf32> to vector<8x1xf32>
    %160 = tpu.iota {dimensions = array<i32: 1>} : vector<8x128xi32>
    %c80_i32 = arith.constant 80 : i32
    %161 = vector.broadcast %c80_i32 : i32 to vector<8x128xi32>
    %162 = arith.cmpi eq, %160, %161 : vector<8x128xi32>
    %cst_50 = arith.constant 0.000000e+00 : f32
    %163 = vector.shape_cast %159 : vector<8x1xf32> to vector<8x1xf32>
    %164 = vector.broadcast %163 : vector<8x1xf32> to vector<8x128xf32>
    %165 = vector.broadcast %cst_50 : f32 to vector<8x128xf32>
    %166 = arith.select %162, %164, %165 : vector<8x128xi1>, vector<8x128xf32>
    %167 = arith.addf %154, %166 : vector<8x128xf32>
    %c0_51 = arith.constant 0 : index
    %c0_52 = arith.constant 0 : index
    %168 = vector.load %arg6[%c0_51, %c0_52] : memref<8x128xf32, #tpu.memory_space<vmem>>, vector<8x128xf32>
    tpu.vector_store %arg6[%c0_51, %c0_52], %167 {strides = array<i32>} : memref<8x128xf32, #tpu.memory_space<vmem>>, vector<8x128xf32>,
    return
  }
}

</mosaic_0001>

<llo_original>
// kernel: manager_policy_forward.1
$region0: #{manager_policy_forward.1}
  #allocation0 [shape = 'u32[]', space=smem, size = 0x4, offset = 0x4, fixed_abs, tag = 'smem constant byte address 0x4 - core index']
  #allocation1 [shape = 'u32[72,128]{1,0:T(1,128)}', space=vmem, size = 0x9000, scoped, tag = 'internal scratch']
  %s0 = inlined_call_operand.vmem [shape: f32[8,32], index: 0, kind: input, shape index: {}]
  %s1 = inlined_call_operand.hbm [shape: bf16[32,1024], index: 1, kind: input, shape index: {}]
  %s2 = inlined_call_operand.hbm [shape: bf16[2,512,256], index: 2, kind: input, shape index: {}]
  %s3 = inlined_call_operand.hbm [shape: bf16[256,128], index: 3, kind: input, shape index: {}]
  %s4 = inlined_call_operand.hbm [shape: f32[3,1024], index: 4, kind: input, shape index: {}]
  %s5 = inlined_call_operand.vmem [shape: f32[8,256], index: 5, kind: input, shape index: {}]
  %s6 = inlined_call_operand.vmem [shape: f32[8,128], index: 6, kind: output, shape index: {}]
  %s7 = sld [smem:[#allocation0]]
  $region50: #{manager_policy_forward.1} parent=0
    _
  %s9 = ssub.s32 1, %s7
  %s10 = scalar_select 0, %s9, %s7
  $region1: #{manager_policy_forward.1} parent=0
    #allocation2 [shape = 'u8[65536]{0}', space=vmem, size = 0x10000, scoped, tag = 'input window, operand 1, single buffered']
    #allocation3 [shape = 's32[1]{0}', space=sflag, size = 0x4, scoped, tag = 'scoped memory for manager_policy_forward.1']
    #allocation4 [shape = 'u8[524288]{0}', space=vmem, size = 0x80000, scoped, tag = 'input window, operand 2, single buffered']
    #allocation5 [shape = 's32[1]{0}', space=sflag, size = 0x4, scoped, tag = 'scoped memory for manager_policy_forward.1']
    #allocation6 [shape = 'u8[65536]{0}', space=vmem, size = 0x10000, scoped, tag = 'input window, operand 3, single buffered']
    #allocation7 [shape = 'u8[16384]{0}', space=vmem, size = 0x4000, scoped, tag = 'input window, operand 4, single buffered']
    #allocation8 [shape = 's32[1]{0}', space=sflag, size = 0x4, scoped, tag = 'scoped memory for manager_policy_forward.1']
    %11 = vsyncpa [#allocation3], 0
    %12 = vsyncpa [#allocation5], 0
    %13 = vsyncpa [#allocation8], 0
    // Predicated region
    $region2: #{manager_policy_forward.1} parent=1 // pred_check
      _
    $region3: #{manager_policy_forward.1} parent=1 // pred_check_branch
      %15 = sbr.rel (0) target = $region5
    $region4: #{manager_policy_forward.1} parent=1 // pred_region
      _
    $region5: #{manager_policy_forward.1} parent=1 // pred_fallthru
      _
    // Predicated region
    $region6: #{manager_policy_forward.1} parent=1 // pred_check
      _
    $region7: #{manager_policy_forward.1} parent=1 // pred_check_branch
      %17 = sbr.rel (0) target = $region9
    $region8: #{manager_policy_forward.1} parent=1 // pred_region
      %19 = vsyncadd [#allocation3], 0
      %s20 = sshll.u32 %s1, 4
      %s21 = int_to_ptr.hbm [resolvable:$true] %s20
      %s22 = sshll.u32 [#allocation2], 4
      %s23 = int_to_ptr.vmem [resolvable:$true] %s22
      %28 = dma.hbm_to_vmem [thread:$0]  %s21, 2048, %s23, [#allocation3], 512, 512, 32
    $region9: #{manager_policy_forward.1} parent=1 // pred_fallthru
      _
    // Predicated region
    $region10: #{manager_policy_forward.1} parent=1 // pred_check
      _
    $region11: #{manager_policy_forward.1} parent=1 // pred_check_branch
      %30 = sbr.rel (0) target = $region13
    $region12: #{manager_policy_forward.1} parent=1 // pred_region
      %32 = vsyncadd [#allocation5], 0
      %s33 = sshll.u32 %s2, 4
      %s34 = int_to_ptr.hbm [resolvable:$true] %s33
      %s35 = sshll.u32 [#allocation4], 4
      %s36 = int_to_ptr.vmem [resolvable:$true] %s35
      %41 = dma.hbm_to_vmem [thread:$0]  %s34, 16384, %s36, [#allocation5], 128, 128, 8
    $region13: #{manager_policy_forward.1} parent=1 // pred_fallthru
      _
    // Predicated region
    $region14: #{manager_policy_forward.1} parent=1 // pred_check
      _
    $region15: #{manager_policy_forward.1} parent=1 // pred_check_branch
      %43 = sbr.rel (0) target = $region17
    $region16: #{manager_policy_forward.1} parent=1 // pred_region
      %45 = vsyncadd [#allocation5], 0
      %s46 = sshll.u32 %s3, 4
      %s47 = int_to_ptr.hbm [resolvable:$true] %s46
      %s48 = sshll.u32 [#allocation6], 4
      %s49 = int_to_ptr.vmem [resolvable:$true] %s48
      %54 = dma.hbm_to_vmem [thread:$0]  %s47, 2048, %s49, [#allocation5], 64, 64, 4
    $region17: #{manager_policy_forward.1} parent=1 // pred_fallthru
      _
    // Predicated region
    $region18: #{manager_policy_forward.1} parent=1 // pred_check
      _
    $region19: #{manager_policy_forward.1} parent=1 // pred_check_branch
      %56 = sbr.rel (0) target = $region21
    $region20: #{manager_policy_forward.1} parent=1 // pred_region
      %58 = vsyncadd [#allocation8], 0
      %s60 = sshll.u32 %s4, 4
      %s61 = int_to_ptr.hbm [resolvable:$true] %s60
      %s62 = sshll.u32 [#allocation7], 4
      %s63 = int_to_ptr.vmem [resolvable:$true] %s62
      %65 = dma.hbm_to_vmem [thread:$0]  %s61, 512, %s63, [#allocation8]
    $region21: #{manager_policy_forward.1} parent=1 // pred_fallthru
      _
    // Predicated region
    $region22: #{manager_policy_forward.1} parent=1 // pred_check
      _
    $region23: #{manager_policy_forward.1} parent=1 // pred_check_branch
      %67 = sbr.rel (0) target = $region25
    $region24: #{manager_policy_forward.1} parent=1 // pred_region
      _
    $region25: #{manager_policy_forward.1} parent=1 // pred_fallthru
      _
    // Predicated region
    $region26: #{manager_policy_forward.1} parent=1 // pred_check
      _
    $region27: #{manager_policy_forward.1} parent=1 // pred_check_branch
      %69 = sbr.rel (0) target = $region29
    $region28: #{manager_policy_forward.1} parent=1 // pred_region
      %71 = dma.done [#allocation3], 2048
    $region29: #{manager_policy_forward.1} parent=1 // pred_fallthru
      _
    // Predicated region
    $region30: #{manager_policy_forward.1} parent=1 // pred_check
      _
    $region31: #{manager_policy_forward.1} parent=1 // pred_check_branch
      %73 = sbr.rel (0) target = $region33
    $region32: #{manager_policy_forward.1} parent=1 // pred_region
      %75 = dma.done [#allocation5], 16384
    $region33: #{manager_policy_forward.1} parent=1 // pred_fallthru
      _
    // Predicated region
    $region34: #{manager_policy_forward.1} parent=1 // pred_check
      _
    $region35: #{manager_policy_forward.1} parent=1 // pred_check_branch
      %77 = sbr.rel (0) target = $region37
    $region36: #{manager_policy_forward.1} parent=1 // pred_region
      %79 = dma.done [#allocation5], 2048
    $region37: #{manager_policy_forward.1} parent=1 // pred_fallthru
      _
    // Predicated region
    $region38: #{manager_policy_forward.1} parent=1 // pred_check
      _
    $region39: #{manager_policy_forward.1} parent=1 // pred_check_branch
      %81 = sbr.rel (0) target = $region41
    $region40: #{manager_policy_forward.1} parent=1 // pred_region
      %83 = dma.done [#allocation8], 512
    $region41: #{manager_policy_forward.1} parent=1 // pred_fallthru
      _
    %v85 = vld [vmem:[%s0] sm:$0xff]
    %v86 = vpack.c.bf16 %v85, %v85
    %v87 = vld [vmem:[#allocation7] sm:$0x77]
    %v88 = vld [vmem:[#allocation7 + $0x8] sm:$0x77]
    %v89 = vld [vmem:[#allocation7 + $0x10] sm:$0x77]
    %v90 = vld [vmem:[#allocation7 + $0x18] sm:$0x77]
    %v91 = vld [vmem:[%s5] sm:$0xff]
    %v92 = vld [vmem:[%s5 + $0x8] sm:$0xff]
    %v93 = vld [vmem:[#allocation2] sm:$0xff]
    %v94 = vld [vmem:[#allocation2 + $0x8] sm:$0xff]
    %v95 = vld [vmem:[#allocation2 + $0x10] sm:$0xff]
    %v96 = vld [vmem:[#allocation2 + $0x18] sm:$0xff]
    %v97 = vld [vmem:[#allocation2 + $0x20] sm:$0xff]
    %v98 = vld [vmem:[#allocation2 + $0x28] sm:$0xff]
    %v99 = vld [vmem:[#allocation2 + $0x30] sm:$0xff]
    %v100 = vld [vmem:[#allocation2 + $0x38] sm:$0xff]
    %v101 = vld [vmem:[#allocation2 + $0x40] sm:$0xff]
    %v102 = vld [vmem:[#allocation2 + $0x48] sm:$0xff]
    %v103 = vld [vmem:[#allocation2 + $0x50] sm:$0xff]
    %v104 = vld [vmem:[#allocation2 + $0x58] sm:$0xff]
    %v105 = vld [vmem:[#allocation2 + $0x60] sm:$0xff]
    %v106 = vld [vmem:[#allocation2 + $0x68] sm:$0xff]
    %v107 = vld [vmem:[#allocation2 + $0x70] sm:$0xff]
    %v108 = vld [vmem:[#allocation2 + $0x78] sm:$0xff]
    %v113 = vperm.slane %v87, 0
    %v114 = vperm.slane %v87, 4
    %v115 = vperm.slane %v88, 0
    %v116 = vperm.slane %v88, 4
    %v117 = vperm.slane %v89, 0
    %v118 = vperm.slane %v89, 4
    %v119 = vperm.slane %v90, 0
    %v120 = vperm.slane %v90, 4
    %v129 = vperm.slane %v113, 0
    %v130 = vperm.slane %v114, 0
    %v131 = vperm.slane %v115, 0
    %v132 = vperm.slane %v116, 0
    %v133 = vperm.slane %v117, 0
    %v134 = vperm.slane %v118, 0
    %v135 = vperm.slane %v119, 0
    %v136 = vperm.slane %v120, 0
    %v153 = vunpack.c.l.b16 %v93
    %v154 = vunpack.c.h.b16 %v93
    %v155 = vunpack.c.l.b16 %v94
    %v156 = vunpack.c.h.b16 %v94
    %v157 = vunpack.c.l.b16 %v95
    %v158 = vunpack.c.h.b16 %v95
    %v159 = vunpack.c.l.b16 %v96
    %v160 = vunpack.c.h.b16 %v96
    %v161 = vunpack.c.l.b16 %v97
    %v162 = vunpack.c.h.b16 %v97
    %v163 = vunpack.c.l.b16 %v98
    %v164 = vunpack.c.h.b16 %v98
    %v165 = vunpack.c.l.b16 %v99
    %v166 = vunpack.c.h.b16 %v99
    %v167 = vunpack.c.l.b16 %v100
    %v168 = vunpack.c.h.b16 %v100
    %v169 = vunpack.c.l.b16 %v101
    %v170 = vunpack.c.h.b16 %v101
    %v171 = vunpack.c.l.b16 %v102
    %v172 = vunpack.c.h.b16 %v102
    %v173 = vunpack.c.l.b16 %v103
    %v174 = vunpack.c.h.b16 %v103
    %v175 = vunpack.c.l.b16 %v104
    %v176 = vunpack.c.h.b16 %v104
    %v177 = vunpack.c.l.b16 %v105
    %v178 = vunpack.c.h.b16 %v105
    %v179 = vunpack.c.l.b16 %v106
    %v180 = vunpack.c.h.b16 %v106
    %v181 = vunpack.c.l.b16 %v107
    %v182 = vunpack.c.h.b16 %v107
    %v183 = vunpack.c.l.b16 %v108
    %v184 = vunpack.c.h.b16 %v108
    %v185 = vpack.c.b16 %v161, %v153
    %v186 = vpack.c.b16 %v162, %v154
    %v187 = vpack.c.b16 %v163, %v155
    %v188 = vpack.c.b16 %v164, %v156
    %v189 = vpack.c.b16 %v165, %v157
    %v190 = vpack.c.b16 %v166, %v158
    %v191 = vpack.c.b16 %v167, %v159
    %v192 = vpack.c.b16 %v168, %v160
    %v193 = vpack.c.b16 %v177, %v169
    %v194 = vpack.c.b16 %v178, %v170
    %v195 = vpack.c.b16 %v179, %v171
    %v196 = vpack.c.b16 %v180, %v172
    %v197 = vpack.c.b16 %v181, %v173
    %v198 = vpack.c.b16 %v182, %v174
    %v199 = vpack.c.b16 %v183, %v175
    %v200 = vpack.c.b16 %v184, %v176
    %vm217 = vcmask 261120
    %v219 = vsel %vm217, %v86, 0
    %221 = vmatpush.bf16.msra.mxu0 0
    %222 = vmatpush.bf16.msra.mxu0 0
    %223 = vmatpush.bf16.msra.mxu0 0
    %224 = vmatpush.bf16.msra.mxu0 0
    %225 = vmatpush.bf16.msra.mxu0 0
    %226 = vmatpush.bf16.msra.mxu0 0
    %227 = vmatpush.bf16.msra.mxu0 %v193
    %228 = vmatpush.bf16.msra.mxu0 %v185
    %229 = vmatmul.bf16.gmra.mxu0 %v219
    %v230 = vpop.f32.mrf.mxu0
    %v231 = vadd.f32 %v129, %v230
    %v232 = vpop.f32.mrf.mxu0
    %233 = vdwg.mxu0
    %234 = vmatpush.bf16.msra.mxu0 0
    %235 = vmatpush.bf16.msra.mxu0 0
    %236 = vmatpush.bf16.msra.mxu0 0
    %237 = vmatpush.bf16.msra.mxu0 0
    %238 = vmatpush.bf16.msra.mxu0 0
    %239 = vmatpush.bf16.msra.mxu0 0
    %240 = vmatpush.bf16.msra.mxu0 %v194
    %241 = vmatpush.bf16.msra.mxu0 %v186
    %242 = vmatmul.bf16.gmra.mxu0 %v219
    %v243 = vpop.f32.mrf.mxu0
    %v244 = vadd.f32 %v130, %v243
    %v245 = vpop.f32.mrf.mxu0
    %246 = vdwg.mxu0
    %247 = vmatpush.bf16.msra.mxu0 0
    %248 = vmatpush.bf16.msra.mxu0 0
    %249 = vmatpush.bf16.msra.mxu0 0
    %250 = vmatpush.bf16.msra.mxu0 0
    %251 = vmatpush.bf16.msra.mxu0 0
    %252 = vmatpush.bf16.msra.mxu0 0
    %253 = vmatpush.bf16.msra.mxu0 %v195
    %254 = vmatpush.bf16.msra.mxu0 %v187
    %255 = vmatmul.bf16.gmra.mxu0 %v219
    %v256 = vpop.f32.mrf.mxu0
    %v257 = vadd.f32 %v131, %v256
    %v258 = vpop.f32.mrf.mxu0
    %259 = vdwg.mxu0
    %260 = vmatpush.bf16.msra.mxu0 0
    %261 = vmatpush.bf16.msra.mxu0 0
    %262 = vmatpush.bf16.msra.mxu0 0
    %263 = vmatpush.bf16.msra.mxu0 0
    %264 = vmatpush.bf16.msra.mxu0 0
    %265 = vmatpush.bf16.msra.mxu0 0
    %266 = vmatpush.bf16.msra.mxu0 %v196
    %267 = vmatpush.bf16.msra.mxu0 %v188
    %268 = vmatmul.bf16.gmra.mxu0 %v219
    %v269 = vpop.f32.mrf.mxu0
    %v270 = vadd.f32 %v132, %v269
    %v271 = vpop.f32.mrf.mxu0
    %272 = vdwg.mxu0
    %273 = vmatpush.bf16.msra.mxu0 0
    %274 = vmatpush.bf16.msra.mxu0 0
    %275 = vmatpush.bf16.msra.mxu0 0
    %276 = vmatpush.bf16.msra.mxu0 0
    %277 = vmatpush.bf16.msra.mxu0 0
    %278 = vmatpush.bf16.msra.mxu0 0
    %279 = vmatpush.bf16.msra.mxu0 %v197
    %280 = vmatpush.bf16.msra.mxu0 %v189
    %281 = vmatmul.bf16.gmra.mxu0 %v219
    %v282 = vpop.f32.mrf.mxu0
    %v283 = vadd.f32 %v133, %v282
    %v284 = vpop.f32.mrf.mxu0
    %285 = vdwg.mxu0
    %286 = vmatpush.bf16.msra.mxu0 0
    %287 = vmatpush.bf16.msra.mxu0 0
    %288 = vmatpush.bf16.msra.mxu0 0
    %289 = vmatpush.bf16.msra.mxu0 0
    %290 = vmatpush.bf16.msra.mxu0 0
    %291 = vmatpush.bf16.msra.mxu0 0
    %292 = vmatpush.bf16.msra.mxu0 %v198
    %293 = vmatpush.bf16.msra.mxu0 %v190
    %294 = vmatmul.bf16.gmra.mxu0 %v219
    %v295 = vpop.f32.mrf.mxu0
    %v296 = vadd.f32 %v134, %v295
    %v297 = vpop.f32.mrf.mxu0
    %298 = vdwg.mxu0
    %299 = vmatpush.bf16.msra.mxu0 0
    %300 = vmatpush.bf16.msra.mxu0 0
    %301 = vmatpush.bf16.msra.mxu0 0
    %302 = vmatpush.bf16.msra.mxu0 0
    %303 = vmatpush.bf16.msra.mxu0 0
    %304 = vmatpush.bf16.msra.mxu0 0
    %305 = vmatpush.bf16.msra.mxu0 %v199
    %306 = vmatpush.bf16.msra.mxu0 %v191
    %307 = vmatmul.bf16.gmra.mxu0 %v219
    %v308 = vpop.f32.mrf.mxu0
    %v309 = vadd.f32 %v135, %v308
    %v310 = vpop.f32.mrf.mxu0
    %311 = vdwg.mxu0
    %312 = vmatpush.bf16.msra.mxu0 0
    %313 = vmatpush.bf16.msra.mxu0 0
    %314 = vmatpush.bf16.msra.mxu0 0
    %315 = vmatpush.bf16.msra.mxu0 0
    %316 = vmatpush.bf16.msra.mxu0 0
    %317 = vmatpush.bf16.msra.mxu0 0
    %318 = vmatpush.bf16.msra.mxu0 %v200
    %319 = vmatpush.bf16.msra.mxu0 %v192
    %320 = vmatmul.bf16.gmra.mxu0 %v219
    %v321 = vpop.f32.mrf.mxu0
    %v322 = vadd.f32 %v136, %v321
    %v323 = vpop.f32.mrf.mxu0
    %324 = vdwg.mxu0
    %v325 = vadd.f32 %v231, %v244
    %v326 = vadd.f32 %v325, %v257
    %v327 = vadd.f32 %v326, %v270
    %328 = vadd.xlane.f32.xlu0 %v327
    %v329 = vpop.xlane.xlu0 %328
    %v330 = vrcp.pop 512.0
    %v331 = vmul.f32 512.0, %v330
    %v332 = vsub.f32 1.0, %v331
    %v333 = vmul.f32 %v330, %v332
    %v334 = vadd.f32 %v330, %v333
    %vm335 = vweird.f32 %v330
    %v336 = vsel %vm335, %v330, %v334
    %v337 = vmul.f32 %v329, %v336
    %v338 = vmul.f32 %v231, %v231
    %v339 = vmul.f32 %v244, %v244
    %v340 = vmul.f32 %v257, %v257
    %v341 = vmul.f32 %v270, %v270
    %v342 = vadd.f32 %v338, %v339
    %v343 = vadd.f32 %v342, %v340
    %v344 = vadd.f32 %v343, %v341
    %345 = vadd.xlane.f32.xlu0 %v344
    %v346 = vpop.xlane.xlu0 %345
    %v347 = vmul.f32 %v346, %v336
    %v348 = vmul.f32 %v337, %v337
    %v349 = vsub.f32 %v347, %v348
    %v350 = vmax.f32 %v349, 0.0
    %v351 = vsub.f32 %v231, %v337
    %v352 = vsub.f32 %v244, %v337
    %v353 = vsub.f32 %v257, %v337
    %v354 = vsub.f32 %v270, %v337
    %v355 = vadd.f32 %v350, 1e-05
    %v356 = vrsqrt.pop %v355
    %v357 = vmul.f32 %v356, %v355
    %v358 = vmul.f32 %v357, %v356
    %v359 = vmul.f32 0.5, %v358
    %v360 = vsub.f32 1.5, %v359
    %v361 = vmul.f32 %v356, %v360
    %vm362 = vweird.f32 %v355
    %vm363 = vweird.f32 %v356
    %vm364 = vmor %vm362, %vm363
    %v365 = vsel %vm364, %v356, %v361
    %v366 = vmul.f32 %v351, %v365
    %v367 = vmul.f32 %v352, %v365
    %v368 = vmul.f32 %v353, %v365
    %v369 = vmul.f32 %v354, %v365
    %v370 = vperm.slane %v87, 1
    %v371 = vperm.slane %v87, 5
    %v372 = vperm.slane %v88, 1
    %v373 = vperm.slane %v88, 5
    %v378 = vperm.slane %v370, 1
    %v379 = vperm.slane %v371, 1
    %v380 = vperm.slane %v372, 1
    %v381 = vperm.slane %v373, 1
    %v382 = vmul.f32 %v366, %v378
    %v383 = vmul.f32 %v367, %v379
    %v384 = vmul.f32 %v368, %v380
    %v385 = vmul.f32 %v369, %v381
    %v386 = vperm.slane %v87, 2
    %v387 = vperm.slane %v87, 6
    %v388 = vperm.slane %v88, 2
    %v389 = vperm.slane %v88, 6
    %v394 = vperm.slane %v386, 2
    %v395 = vperm.slane %v387, 2
    %v396 = vperm.slane %v388, 2
    %v397 = vperm.slane %v389, 2
    %v398 = vadd.f32 %v382, %v394
    %v399 = vadd.f32 %v383, %v395
    %v400 = vadd.f32 %v384, %v396
    %v401 = vadd.f32 %v385, %v397
    %vm402 = vcmp.gt.f32.partialorder %v398, 0.0
    %vm403 = vcmp.gt.f32.partialorder %v399, 0.0
    %vm404 = vcmp.gt.f32.partialorder %v400, 0.0
    %vm405 = vcmp.gt.f32.partialorder %v401, 0.0
    %v406 = vmul.f32 %v398, 0.2
    %v407 = vmul.f32 %v399, 0.2
    %v408 = vmul.f32 %v400, 0.2
    %v409 = vmul.f32 %v401, 0.2
    %v410 = vsel %vm402, %v398, %v406
    %v411 = vsel %vm403, %v399, %v407
    %v412 = vsel %vm404, %v400, %v408
    %v413 = vsel %vm405, %v401, %v409
    %v414 = vadd.f32 %v283, %v296
    %v415 = vadd.f32 %v414, %v309
    %v416 = vadd.f32 %v415, %v322
    %417 = vadd.xlane.f32.xlu0 %v416
    %v418 = vpop.xlane.xlu0 %417
    %v419 = vmul.f32 %v418, %v336
    %v420 = vmul.f32 %v283, %v283
    %v421 = vmul.f32 %v296, %v296
    %v422 = vmul.f32 %v309, %v309
    %v423 = vmul.f32 %v322, %v322
    %v424 = vadd.f32 %v420, %v421
    %v425 = vadd.f32 %v424, %v422
    %v426 = vadd.f32 %v425, %v423
    %427 = vadd.xlane.f32.xlu0 %v426
    %v428 = vpop.xlane.xlu0 %427
    %v429 = vmul.f32 %v428, %v336
    %v430 = vmul.f32 %v419, %v419
    %v431 = vsub.f32 %v429, %v430
    %v432 = vmax.f32 %v431, 0.0
    %v433 = vsub.f32 %v283, %v419
    %v434 = vsub.f32 %v296, %v419
    %v435 = vsub.f32 %v309, %v419
    %v436 = vsub.f32 %v322, %v419
    %v437 = vadd.f32 %v432, 1e-05
    %v438 = vrsqrt.pop %v437
    %v439 = vmul.f32 %v438, %v437
    %v440 = vmul.f32 %v439, %v438
    %v441 = vmul.f32 0.5, %v440
    %v442 = vsub.f32 1.5, %v441
    %v443 = vmul.f32 %v438, %v442
    %vm444 = vweird.f32 %v437
    %vm445 = vweird.f32 %v438
    %vm446 = vmor %vm444, %vm445
    %v447 = vsel %vm446, %v438, %v443
    %v448 = vmul.f32 %v433, %v447
    %v449 = vmul.f32 %v434, %v447
    %v450 = vmul.f32 %v435, %v447
    %v451 = vmul.f32 %v436, %v447
    %v452 = vperm.slane %v89, 1
    %v453 = vperm.slane %v89, 5
    %v454 = vperm.slane %v90, 1
    %v455 = vperm.slane %v90, 5
    %v460 = vperm.slane %v452, 1
    %v461 = vperm.slane %v453, 1
    %v462 = vperm.slane %v454, 1
    %v463 = vperm.slane %v455, 1
    %v464 = vmul.f32 %v448, %v460
    %v465 = vmul.f32 %v449, %v461
    %v466 = vmul.f32 %v450, %v462
    %v467 = vmul.f32 %v451, %v463
    %v468 = vperm.slane %v89, 2
    %v469 = vperm.slane %v89, 6
    %v470 = vperm.slane %v90, 2
    %v471 = vperm.slane %v90, 6
    %v476 = vperm.slane %v468, 2
    %v477 = vperm.slane %v469, 2
    %v478 = vperm.slane %v470, 2
    %v479 = vperm.slane %v471, 2
    %v480 = vadd.f32 %v464, %v476
    %v481 = vadd.f32 %v465, %v477
    %v482 = vadd.f32 %v466, %v478
    %v483 = vadd.f32 %v467, %v479
    %vm484 = vcmp.gt.f32.partialorder %v480, 0.0
    %vm485 = vcmp.gt.f32.partialorder %v481, 0.0
    %vm486 = vcmp.gt.f32.partialorder %v482, 0.0
    %vm487 = vcmp.gt.f32.partialorder %v483, 0.0
    %v488 = vmul.f32 %v480, 0.2
    %v489 = vmul.f32 %v481, 0.2
    %v490 = vmul.f32 %v482, 0.2
    %v491 = vmul.f32 %v483, 0.2
    %v492 = vsel %vm484, %v480, %v488
    %v493 = vsel %vm485, %v481, %v489
    %v494 = vsel %vm486, %v482, %v490
    %v495 = vsel %vm487, %v483, %v491
    %v496 = vpack.c.bf16 %v410, %v410
    %v497 = vpack.c.bf16 %v411, %v411
    %v498 = vpack.c.bf16 %v412, %v412
    %v499 = vpack.c.bf16 %v413, %v413
    %v500 = vld [vmem:[#allocation4] sm:$0xff]
    %v501 = vld [vmem:[#allocation4 + $0x8] sm:$0xff]
    %v502 = vld [vmem:[#allocation4 + $0x10] sm:$0xff]
    %v503 = vld [vmem:[#allocation4 + $0x18] sm:$0xff]
    %v504 = vld [vmem:[#allocation4 + $0x20] sm:$0xff]
    %v505 = vld [vmem:[#allocation4 + $0x28] sm:$0xff]
    %v506 = vld [vmem:[#allocation4 + $0x30] sm:$0xff]
    %v507 = vld [vmem:[#allocation4 + $0x38] sm:$0xff]
    %v508 = vld [vmem:[#allocation4 + $0x40] sm:$0xff]
    %v509 = vld [vmem:[#allocation4 + $0x48] sm:$0xff]
    %v510 = vld [vmem:[#allocation4 + $0x50] sm:$0xff]
    %v511 = vld [vmem:[#allocation4 + $0x58] sm:$0xff]
    %v512 = vld [vmem:[#allocation4 + $0x60] sm:$0xff]
    %v513 = vld [vmem:[#allocation4 + $0x68] sm:$0xff]
    %v514 = vld [vmem:[#allocation4 + $0x70] sm:$0xff]
    %v515 = vld [vmem:[#allocation4 + $0x78] sm:$0xff]
    %v516 = vld [vmem:[#allocation4 + $0x80] sm:$0xff]
    %v517 = vld [vmem:[#allocation4 + $0x88] sm:$0xff]
    %v518 = vld [vmem:[#allocation4 + $0x90] sm:$0xff]
    %v519 = vld [vmem:[#allocation4 + $0x98] sm:$0xff]
    %v520 = vld [vmem:[#allocation4 + $0xa0] sm:$0xff]
    %v521 = vld [vmem:[#allocation4 + $0xa8] sm:$0xff]
    %v522 = vld [vmem:[#allocation4 + $0xb0] sm:$0xff]
    %v523 = vld [vmem:[#allocation4 + $0xb8] sm:$0xff]
    %v524 = vld [vmem:[#allocation4 + $0xc0] sm:$0xff]
    %v525 = vld [vmem:[#allocation4 + $0xc8] sm:$0xff]
    %v526 = vld [vmem:[#allocation4 + $0xd0] sm:$0xff]
    %v527 = vld [vmem:[#allocation4 + $0xd8] sm:$0xff]
    %v528 = vld [vmem:[#allocation4 + $0xe0] sm:$0xff]
    %v529 = vld [vmem:[#allocation4 + $0xe8] sm:$0xff]
    %v530 = vld [vmem:[#allocation4 + $0xf0] sm:$0xff]
    %v531 = vld [vmem:[#allocation4 + $0xf8] sm:$0xff]
    %v532 = vld [vmem:[#allocation4 + $0x100] sm:$0xff]
    %v533 = vld [vmem:[#allocation4 + $0x108] sm:$0xff]
    %v534 = vld [vmem:[#allocation4 + $0x110] sm:$0xff]
    %v535 = vld [vmem:[#allocation4 + $0x118] sm:$0xff]
    %v536 = vld [vmem:[#allocation4 + $0x120] sm:$0xff]
    %v537 = vld [vmem:[#allocation4 + $0x128] sm:$0xff]
    %v538 = vld [vmem:[#allocation4 + $0x130] sm:$0xff]
    %v539 = vld [vmem:[#allocation4 + $0x138] sm:$0xff]
    %v540 = vld [vmem:[#allocation4 + $0x140] sm:$0xff]
    %v541 = vld [vmem:[#allocation4 + $0x148] sm:$0xff]
    %v542 = vld [vmem:[#allocation4 + $0x150] sm:$0xff]
    %v543 = vld [vmem:[#allocation4 + $0x158] sm:$0xff]
    %v544 = vld [vmem:[#allocation4 + $0x160] sm:$0xff]
    %v545 = vld [vmem:[#allocation4 + $0x168] sm:$0xff]
    %v546 = vld [vmem:[#allocation4 + $0x170] sm:$0xff]
    %v547 = vld [vmem:[#allocation4 + $0x178] sm:$0xff]
    %v548 = vld [vmem:[#allocation4 + $0x180] sm:$0xff]
    %v549 = vld [vmem:[#allocation4 + $0x188] sm:$0xff]
    %v550 = vld [vmem:[#allocation4 + $0x190] sm:$0xff]
    %v551 = vld [vmem:[#allocation4 + $0x198] sm:$0xff]
    %v552 = vld [vmem:[#allocation4 + $0x1a0] sm:$0xff]
    %v553 = vld [vmem:[#allocation4 + $0x1a8] sm:$0xff]
    %v554 = vld [vmem:[#allocation4 + $0x1b0] sm:$0xff]
    %v555 = vld [vmem:[#allocation4 + $0x1b8] sm:$0xff]
    %v556 = vld [vmem:[#allocation4 + $0x1c0] sm:$0xff]
    %v557 = vld [vmem:[#allocation4 + $0x1c8] sm:$0xff]
    %v558 = vld [vmem:[#allocation4 + $0x1d0] sm:$0xff]
    %v559 = vld [vmem:[#allocation4 + $0x1d8] sm:$0xff]
    %v560 = vld [vmem:[#allocation4 + $0x1e0] sm:$0xff]
    %v561 = vld [vmem:[#allocation4 + $0x1e8] sm:$0xff]
    %v562 = vld [vmem:[#allocation4 + $0x1f0] sm:$0xff]
    %v563 = vld [vmem:[#allocation4 + $0x1f8] sm:$0xff]
    %v564 = vperm.slane %v91, 0
    %v565 = vperm.slane %v92, 0
    %v630 = vunpack.c.l.b16 %v500
    %v631 = vunpack.c.h.b16 %v500
    %v632 = vunpack.c.l.b16 %v501
    %v633 = vunpack.c.h.b16 %v501
    %v634 = vunpack.c.l.b16 %v502
    %v635 = vunpack.c.h.b16 %v502
    %v636 = vunpack.c.l.b16 %v503
    %v637 = vunpack.c.h.b16 %v503
    %v638 = vunpack.c.l.b16 %v504
    %v639 = vunpack.c.h.b16 %v504
    %v640 = vunpack.c.l.b16 %v505
    %v641 = vunpack.c.h.b16 %v505
    %v642 = vunpack.c.l.b16 %v506
    %v643 = vunpack.c.h.b16 %v506
    %v644 = vunpack.c.l.b16 %v507
    %v645 = vunpack.c.h.b16 %v507
    %v646 = vunpack.c.l.b16 %v508
    %v647 = vunpack.c.h.b16 %v508
    %v648 = vunpack.c.l.b16 %v509
    %v649 = vunpack.c.h.b16 %v509
    %v650 = vunpack.c.l.b16 %v510
    %v651 = vunpack.c.h.b16 %v510
    %v652 = vunpack.c.l.b16 %v511
    %v653 = vunpack.c.h.b16 %v511
    %v654 = vunpack.c.l.b16 %v512
    %v655 = vunpack.c.h.b16 %v512
    %v656 = vunpack.c.l.b16 %v513
    %v657 = vunpack.c.h.b16 %v513
    %v658 = vunpack.c.l.b16 %v514
    %v659 = vunpack.c.h.b16 %v514
    %v660 = vunpack.c.l.b16 %v515
    %v661 = vunpack.c.h.b16 %v515
    %v662 = vunpack.c.l.b16 %v516
    %v663 = vunpack.c.h.b16 %v516
    %v664 = vunpack.c.l.b16 %v517
    %v665 = vunpack.c.h.b16 %v517
    %v666 = vunpack.c.l.b16 %v518
    %v667 = vunpack.c.h.b16 %v518
    %v668 = vunpack.c.l.b16 %v519
    %v669 = vunpack.c.h.b16 %v519
    %v670 = vunpack.c.l.b16 %v520
    %v671 = vunpack.c.h.b16 %v520
    %v672 = vunpack.c.l.b16 %v521
    %v673 = vunpack.c.h.b16 %v521
    %v674 = vunpack.c.l.b16 %v522
    %v675 = vunpack.c.h.b16 %v522
    %v676 = vunpack.c.l.b16 %v523
    %v677 = vunpack.c.h.b16 %v523
    %v678 = vunpack.c.l.b16 %v524
    %v679 = vunpack.c.h.b16 %v524
    %v680 = vunpack.c.l.b16 %v525
    %v681 = vunpack.c.h.b16 %v525
    %v682 = vunpack.c.l.b16 %v526
    %v683 = vunpack.c.h.b16 %v526
    %v684 = vunpack.c.l.b16 %v527
    %v685 = vunpack.c.h.b16 %v527
    %v686 = vunpack.c.l.b16 %v528
    %v687 = vunpack.c.h.b16 %v528
    %v688 = vunpack.c.l.b16 %v529
    %v689 = vunpack.c.h.b16 %v529
    %v690 = vunpack.c.l.b16 %v530
    %v691 = vunpack.c.h.b16 %v530
    %v692 = vunpack.c.l.b16 %v531
    %v693 = vunpack.c.h.b16 %v531
    %v694 = vunpack.c.l.b16 %v532
    %v695 = vunpack.c.h.b16 %v532
    %v696 = vunpack.c.l.b16 %v533
    %v697 = vunpack.c.h.b16 %v533
    %v698 = vunpack.c.l.b16 %v534
    %v699 = vunpack.c.h.b16 %v534
    %v700 = vunpack.c.l.b16 %v535
    %v701 = vunpack.c.h.b16 %v535
    %v702 = vunpack.c.l.b16 %v536
    %v703 = vunpack.c.h.b16 %v536
    %v704 = vunpack.c.l.b16 %v537
    %v705 = vunpack.c.h.b16 %v537
    %v706 = vunpack.c.l.b16 %v538
    %v707 = vunpack.c.h.b16 %v538
    %v708 = vunpack.c.l.b16 %v539
    %v709 = vunpack.c.h.b16 %v539
    %v710 = vunpack.c.l.b16 %v540
    %v711 = vunpack.c.h.b16 %v540
    %v712 = vunpack.c.l.b16 %v541
    %v713 = vunpack.c.h.b16 %v541
    %v714 = vunpack.c.l.b16 %v542
    %v715 = vunpack.c.h.b16 %v542
    %v716 = vunpack.c.l.b16 %v543
    %v717 = vunpack.c.h.b16 %v543
    %v718 = vunpack.c.l.b16 %v544
    %v719 = vunpack.c.h.b16 %v544
    %v720 = vunpack.c.l.b16 %v545
    %v721 = vunpack.c.h.b16 %v545
    %v722 = vunpack.c.l.b16 %v546
    %v723 = vunpack.c.h.b16 %v546
    %v724 = vunpack.c.l.b16 %v547
    %v725 = vunpack.c.h.b16 %v547
    %v726 = vunpack.c.l.b16 %v548
    %v727 = vunpack.c.h.b16 %v548
    %v728 = vunpack.c.l.b16 %v549
    %v729 = vunpack.c.h.b16 %v549
    %v730 = vunpack.c.l.b16 %v550
    %v731 = vunpack.c.h.b16 %v550
    %v732 = vunpack.c.l.b16 %v551
    %v733 = vunpack.c.h.b16 %v551
    %v734 = vunpack.c.l.b16 %v552
    %v735 = vunpack.c.h.b16 %v552
    %v736 = vunpack.c.l.b16 %v553
    %v737 = vunpack.c.h.b16 %v553
    %v738 = vunpack.c.l.b16 %v554
    %v739 = vunpack.c.h.b16 %v554
    %v740 = vunpack.c.l.b16 %v555
    %v741 = vunpack.c.h.b16 %v555
    %v742 = vunpack.c.l.b16 %v556
    %v743 = vunpack.c.h.b16 %v556
    %v744 = vunpack.c.l.b16 %v557
    %v745 = vunpack.c.h.b16 %v557
    %v746 = vunpack.c.l.b16 %v558
    %v747 = vunpack.c.h.b16 %v558
    %v748 = vunpack.c.l.b16 %v559
    %v749 = vunpack.c.h.b16 %v559
    %v750 = vunpack.c.l.b16 %v560
    %v751 = vunpack.c.h.b16 %v560
    %v752 = vunpack.c.l.b16 %v561
    %v753 = vunpack.c.h.b16 %v561
    %v754 = vunpack.c.l.b16 %v562
    %v755 = vunpack.c.h.b16 %v562
    %v756 = vunpack.c.l.b16 %v563
    %v757 = vunpack.c.h.b16 %v563
    %v758 = vpack.c.b16 %v632, %v630
    %v759 = vpack.c.b16 %v633, %v631
    %v760 = vpack.c.b16 %v636, %v634
    %v761 = vpack.c.b16 %v637, %v635
    %v762 = vpack.c.b16 %v640, %v638
    %v763 = vpack.c.b16 %v641, %v639
    %v764 = vpack.c.b16 %v644, %v642
    %v765 = vpack.c.b16 %v645, %v643
    %v766 = vpack.c.b16 %v648, %v646
    %v767 = vpack.c.b16 %v649, %v647
    %v768 = vpack.c.b16 %v652, %v650
    %v769 = vpack.c.b16 %v653, %v651
    %v770 = vpack.c.b16 %v656, %v654
    %v771 = vpack.c.b16 %v657, %v655
    %v772 = vpack.c.b16 %v660, %v658
    %v773 = vpack.c.b16 %v661, %v659
    %v774 = vpack.c.b16 %v664, %v662
    %v775 = vpack.c.b16 %v665, %v663
    %v776 = vpack.c.b16 %v668, %v666
    %v777 = vpack.c.b16 %v669, %v667
    %v778 = vpack.c.b16 %v672, %v670
    %v779 = vpack.c.b16 %v673, %v671
    %v780 = vpack.c.b16 %v676, %v674
    %v781 = vpack.c.b16 %v677, %v675
    %v782 = vpack.c.b16 %v680, %v678
    %v783 = vpack.c.b16 %v681, %v679
    %v784 = vpack.c.b16 %v684, %v682
    %v785 = vpack.c.b16 %v685, %v683
    %v786 = vpack.c.b16 %v688, %v686
    %v787 = vpack.c.b16 %v689, %v687
    %v788 = vpack.c.b16 %v692, %v690
    %v789 = vpack.c.b16 %v693, %v691
    %v790 = vpack.c.b16 %v696, %v694
    %v791 = vpack.c.b16 %v697, %v695
    %v792 = vpack.c.b16 %v700, %v698
    %v793 = vpack.c.b16 %v701, %v699
    %v794 = vpack.c.b16 %v704, %v702
    %v795 = vpack.c.b16 %v705, %v703
    %v796 = vpack.c.b16 %v708, %v706
    %v797 = vpack.c.b16 %v709, %v707
    %v798 = vpack.c.b16 %v712, %v710
    %v799 = vpack.c.b16 %v713, %v711
    %v800 = vpack.c.b16 %v716, %v714
    %v801 = vpack.c.b16 %v717, %v715
    %v802 = vpack.c.b16 %v720, %v718
    %v803 = vpack.c.b16 %v721, %v719
    %v804 = vpack.c.b16 %v724, %v722
    %v805 = vpack.c.b16 %v725, %v723
    %v806 = vpack.c.b16 %v728, %v726
    %v807 = vpack.c.b16 %v729, %v727
    %v808 = vpack.c.b16 %v732, %v730
    %v809 = vpack.c.b16 %v733, %v731
    %v810 = vpack.c.b16 %v736, %v734
    %v811 = vpack.c.b16 %v737, %v735
    %v812 = vpack.c.b16 %v740, %v738
    %v813 = vpack.c.b16 %v741, %v739
    %v814 = vpack.c.b16 %v744, %v742
    %v815 = vpack.c.b16 %v745, %v743
    %v816 = vpack.c.b16 %v748, %v746
    %v817 = vpack.c.b16 %v749, %v747
    %v818 = vpack.c.b16 %v752, %v750
    %v819 = vpack.c.b16 %v753, %v751
    %v820 = vpack.c.b16 %v756, %v754
    %v821 = vpack.c.b16 %v757, %v755
    %886 = vmatpush.bf16.msra.mxu0 %v772
    %887 = vmatpush.bf16.msra.mxu0 %v770
    %888 = vmatpush.bf16.msra.mxu0 %v768
    %889 = vmatpush.bf16.msra.mxu0 %v766
    %890 = vmatpush.bf16.msra.mxu0 %v764
    %891 = vmatpush.bf16.msra.mxu0 %v762
    %892 = vmatpush.bf16.msra.mxu0 %v760
    %893 = vmatpush.bf16.msra.mxu0 %v758
    %894 = vmatmul.bf16.gmra.mxu0 %v496
    %v895 = vpop.f32.mrf.mxu0
    %v896 = vadd.f32 %v564, %v895
    %v897 = vpop.f32.mrf.mxu0
    %898 = vdwg.mxu0
    %899 = vmatpush.bf16.msra.mxu0 %v788
    %900 = vmatpush.bf16.msra.mxu0 %v786
    %901 = vmatpush.bf16.msra.mxu0 %v784
    %902 = vmatpush.bf16.msra.mxu0 %v782
    %903 = vmatpush.bf16.msra.mxu0 %v780
    %904 = vmatpush.bf16.msra.mxu0 %v778
    %905 = vmatpush.bf16.msra.mxu0 %v776
    %906 = vmatpush.bf16.msra.mxu0 %v774
    %907 = vmatmul.bf16.gmra.mxu0 %v497
    %v908 = vpop.f32.mrf.mxu0
    %v909 = vadd.f32 %v896, %v908
    %v910 = vpop.f32.mrf.mxu0
    %911 = vdwg.mxu0
    %912 = vmatpush.bf16.msra.mxu0 %v804
    %913 = vmatpush.bf16.msra.mxu0 %v802
    %914 = vmatpush.bf16.msra.mxu0 %v800
    %915 = vmatpush.bf16.msra.mxu0 %v798
    %916 = vmatpush.bf16.msra.mxu0 %v796
    %917 = vmatpush.bf16.msra.mxu0 %v794
    %918 = vmatpush.bf16.msra.mxu0 %v792
    %919 = vmatpush.bf16.msra.mxu0 %v790
    %920 = vmatmul.bf16.gmra.mxu0 %v498
    %v921 = vpop.f32.mrf.mxu0
    %v922 = vadd.f32 %v909, %v921
    %v923 = vpop.f32.mrf.mxu0
    %924 = vdwg.mxu0
    %925 = vmatpush.bf16.msra.mxu0 %v820
    %926 = vmatpush.bf16.msra.mxu0 %v818
    %927 = vmatpush.bf16.msra.mxu0 %v816
    %928 = vmatpush.bf16.msra.mxu0 %v814
    %929 = vmatpush.bf16.msra.mxu0 %v812
    %930 = vmatpush.bf16.msra.mxu0 %v810
    %931 = vmatpush.bf16.msra.mxu0 %v808
    %932 = vmatpush.bf16.msra.mxu0 %v806
    %933 = vmatmul.bf16.gmra.mxu0 %v499
    %v934 = vpop.f32.mrf.mxu0
    %v935 = vadd.f32 %v922, %v934
    %v936 = vpop.f32.mrf.mxu0
    %937 = vdwg.mxu0
    %938 = vmatpush.bf16.msra.mxu0 %v773
    %939 = vmatpush.bf16.msra.mxu0 %v771
    %940 = vmatpush.bf16.msra.mxu0 %v769
    %941 = vmatpush.bf16.msra.mxu0 %v767
    %942 = vmatpush.bf16.msra.mxu0 %v765
    %943 = vmatpush.bf16.msra.mxu0 %v763
    %944 = vmatpush.bf16.msra.mxu0 %v761
    %945 = vmatpush.bf16.msra.mxu0 %v759
    %946 = vmatmul.bf16.gmra.mxu0 %v496
    %v947 = vpop.f32.mrf.mxu0
    %v948 = vadd.f32 %v565, %v947
    %v949 = vpop.f32.mrf.mxu0
    %950 = vdwg.mxu0
    %951 = vmatpush.bf16.msra.mxu0 %v789
    %952 = vmatpush.bf16.msra.mxu0 %v787
    %953 = vmatpush.bf16.msra.mxu0 %v785
    %954 = vmatpush.bf16.msra.mxu0 %v783
    %955 = vmatpush.bf16.msra.mxu0 %v781
    %956 = vmatpush.bf16.msra.mxu0 %v779
    %957 = vmatpush.bf16.msra.mxu0 %v777
    %958 = vmatpush.bf16.msra.mxu0 %v775
    %959 = vmatmul.bf16.gmra.mxu0 %v497
    %v960 = vpop.f32.mrf.mxu0
    %v961 = vadd.f32 %v948, %v960
    %v962 = vpop.f32.mrf.mxu0
    %963 = vdwg.mxu0
    %964 = vmatpush.bf16.msra.mxu0 %v805
    %965 = vmatpush.bf16.msra.mxu0 %v803
    %966 = vmatpush.bf16.msra.mxu0 %v801
    %967 = vmatpush.bf16.msra.mxu0 %v799
    %968 = vmatpush.bf16.msra.mxu0 %v797
    %969 = vmatpush.bf16.msra.mxu0 %v795
    %970 = vmatpush.bf16.msra.mxu0 %v793
    %971 = vmatpush.bf16.msra.mxu0 %v791
    %972 = vmatmul.bf16.gmra.mxu0 %v498
    %v973 = vpop.f32.mrf.mxu0
    %v974 = vadd.f32 %v961, %v973
    %v975 = vpop.f32.mrf.mxu0
    %976 = vdwg.mxu0
    %977 = vmatpush.bf16.msra.mxu0 %v821
    %978 = vmatpush.bf16.msra.mxu0 %v819
    %979 = vmatpush.bf16.msra.mxu0 %v817
    %980 = vmatpush.bf16.msra.mxu0 %v815
    %981 = vmatpush.bf16.msra.mxu0 %v813
    %982 = vmatpush.bf16.msra.mxu0 %v811
    %983 = vmatpush.bf16.msra.mxu0 %v809
    %984 = vmatpush.bf16.msra.mxu0 %v807
    %985 = vmatmul.bf16.gmra.mxu0 %v499
    %v986 = vpop.f32.mrf.mxu0
    %v987 = vadd.f32 %v974, %v986
    %v988 = vpop.f32.mrf.mxu0
    %989 = vdwg.mxu0
    %v990 = vadd.f32 %v935, %v987
    %991 = vadd.xlane.f32.xlu0 %v990
    %v992 = vpop.xlane.xlu0 %991
    %v993 = vrcp.pop 256.0
    %v994 = vmul.f32 256.0, %v993
    %v995 = vsub.f32 1.0, %v994
    %v996 = vmul.f32 %v993, %v995
    %v997 = vadd.f32 %v993, %v996
    %vm998 = vweird.f32 %v993
    %v999 = vsel %vm998, %v993, %v997
    %v1000 = vmul.f32 %v992, %v999
    %v1001 = vmul.f32 %v935, %v935
    %v1002 = vmul.f32 %v987, %v987
    %v1003 = vadd.f32 %v1001, %v1002
    %1004 = vadd.xlane.f32.xlu0 %v1003
    %v1005 = vpop.xlane.xlu0 %1004
    %v1006 = vmul.f32 %v1005, %v999
    %v1007 = vmul.f32 %v1000, %v1000
    %v1008 = vsub.f32 %v1006, %v1007
    %v1009 = vmax.f32 %v1008, 0.0
    %v1010 = vsub.f32 %v935, %v1000
    %v1011 = vsub.f32 %v987, %v1000
    %v1012 = vadd.f32 %v1009, 1e-05
    %v1013 = vrsqrt.pop %v1012
    %v1014 = vmul.f32 %v1013, %v1012
    %v1015 = vmul.f32 %v1014, %v1013
    %v1016 = vmul.f32 0.5, %v1015
    %v1017 = vsub.f32 1.5, %v1016
    %v1018 = vmul.f32 %v1013, %v1017
    %vm1019 = vweird.f32 %v1012
    %vm1020 = vweird.f32 %v1013
    %vm1021 = vmor %vm1019, %vm1020
    %v1022 = vsel %vm1021, %v1013, %v1018
    %v1023 = vmul.f32 %v1010, %v1022
    %v1024 = vmul.f32 %v1011, %v1022
    %v1025 = vperm.slane %v91, 1
    %v1026 = vperm.slane %v92, 1
    %v1027 = vmul.f32 %v1023, %v1025
    %v1028 = vmul.f32 %v1024, %v1026
    %v1029 = vperm.slane %v91, 2
    %v1030 = vperm.slane %v92, 2
    %v1031 = vadd.f32 %v1027, %v1029
    %v1032 = vadd.f32 %v1028, %v1030
    %vm1033 = vcmp.gt.f32.partialorder %v1031, 0.0
    %vm1034 = vcmp.gt.f32.partialorder %v1032, 0.0
    %v1035 = vmul.f32 %v1031, 0.2
    %v1036 = vmul.f32 %v1032, 0.2
    %v1037 = vsel %vm1033, %v1031, %v1035
    %v1038 = vsel %vm1034, %v1032, %v1036
    %v1039 = vpack.c.bf16 %v492, %v492
    %v1040 = vpack.c.bf16 %v493, %v493
    %v1041 = vpack.c.bf16 %v494, %v494
    %v1042 = vpack.c.bf16 %v495, %v495
    %s1043 = scalar_lea.vmem [#allocation4], 512
    %v1044 = vld [vmem:[%s1043] sm:$0xff]
    %v1045 = vld [vmem:[%s1043 + $0x8] sm:$0xff]
    %v1046 = vld [vmem:[%s1043 + $0x10] sm:$0xff]
    %v1047 = vld [vmem:[%s1043 + $0x18] sm:$0xff]
    %v1048 = vld [vmem:[%s1043 + $0x20] sm:$0xff]
    %v1049 = vld [vmem:[%s1043 + $0x28] sm:$0xff]
    %v1050 = vld [vmem:[%s1043 + $0x30] sm:$0xff]
    %v1051 = vld [vmem:[%s1043 + $0x38] sm:$0xff]
    %v1052 = vld [vmem:[%s1043 + $0x40] sm:$0xff]
    %v1053 = vld [vmem:[%s1043 + $0x48] sm:$0xff]
    %v1054 = vld [vmem:[%s1043 + $0x50] sm:$0xff]
    %v1055 = vld [vmem:[%s1043 + $0x58] sm:$0xff]
    %v1056 = vld [vmem:[%s1043 + $0x60] sm:$0xff]
    %v1057 = vld [vmem:[%s1043 + $0x68] sm:$0xff]
    %v1058 = vld [vmem:[%s1043 + $0x70] sm:$0xff]
    %v1059 = vld [vmem:[%s1043 + $0x78] sm:$0xff]
    %v1060 = vld [vmem:[%s1043 + $0x80] sm:$0xff]
    %v1061 = vld [vmem:[%s1043 + $0x88] sm:$0xff]
    %v1062 = vld [vmem:[%s1043 + $0x90] sm:$0xff]
    %v1063 = vld [vmem:[%s1043 + $0x98] sm:$0xff]
    %v1064 = vld [vmem:[%s1043 + $0xa0] sm:$0xff]
    %v1065 = vld [vmem:[%s1043 + $0xa8] sm:$0xff]
    %v1066 = vld [vmem:[%s1043 + $0xb0] sm:$0xff]
    %v1067 = vld [vmem:[%s1043 + $0xb8] sm:$0xff]
    %v1068 = vld [vmem:[%s1043 + $0xc0] sm:$0xff]
    %v1069 = vld [vmem:[%s1043 + $0xc8] sm:$0xff]
    %v1070 = vld [vmem:[%s1043 + $0xd0] sm:$0xff]
    %v1071 = vld [vmem:[%s1043 + $0xd8] sm:$0xff]
    %v1072 = vld [vmem:[%s1043 + $0xe0] sm:$0xff]
    %v1073 = vld [vmem:[%s1043 + $0xe8] sm:$0xff]
    %v1074 = vld [vmem:[%s1043 + $0xf0] sm:$0xff]
    %v1075 = vld [vmem:[%s1043 + $0xf8] sm:$0xff]
    %v1076 = vld [vmem:[%s1043 + $0x100] sm:$0xff]
    %v1077 = vld [vmem:[%s1043 + $0x108] sm:$0xff]
    %v1078 = vld [vmem:[%s1043 + $0x110] sm:$0xff]
    %v1079 = vld [vmem:[%s1043 + $0x118] sm:$0xff]
    %v1080 = vld [vmem:[%s1043 + $0x120] sm:$0xff]
    %v1081 = vld [vmem:[%s1043 + $0x128] sm:$0xff]
    %v1082 = vld [vmem:[%s1043 + $0x130] sm:$0xff]
    %v1083 = vld [vmem:[%s1043 + $0x138] sm:$0xff]
    %v1084 = vld [vmem:[%s1043 + $0x140] sm:$0xff]
    %v1085 = vld [vmem:[%s1043 + $0x148] sm:$0xff]
    %v1086 = vld [vmem:[%s1043 + $0x150] sm:$0xff]
    %v1087 = vld [vmem:[%s1043 + $0x158] sm:$0xff]
    %v1088 = vld [vmem:[%s1043 + $0x160] sm:$0xff]
    %v1089 = vld [vmem:[%s1043 + $0x168] sm:$0xff]
    %v1090 = vld [vmem:[%s1043 + $0x170] sm:$0xff]
    %v1091 = vld [vmem:[%s1043 + $0x178] sm:$0xff]
    %v1092 = vld [vmem:[%s1043 + $0x180] sm:$0xff]
    %v1093 = vld [vmem:[%s1043 + $0x188] sm:$0xff]
    %v1094 = vld [vmem:[%s1043 + $0x190] sm:$0xff]
    %v1095 = vld [vmem:[%s1043 + $0x198] sm:$0xff]
    %v1096 = vld [vmem:[%s1043 + $0x1a0] sm:$0xff]
    %v1097 = vld [vmem:[%s1043 + $0x1a8] sm:$0xff]
    %v1098 = vld [vmem:[%s1043 + $0x1b0] sm:$0xff]
    %v1099 = vld [vmem:[%s1043 + $0x1b8] sm:$0xff]
    %v1100 = vld [vmem:[%s1043 + $0x1c0] sm:$0xff]
    %v1101 = vld [vmem:[%s1043 + $0x1c8] sm:$0xff]
    %v1102 = vld [vmem:[%s1043 + $0x1d0] sm:$0xff]
    %v1103 = vld [vmem:[%s1043 + $0x1d8] sm:$0xff]
    %v1104 = vld [vmem:[%s1043 + $0x1e0] sm:$0xff]
    %v1105 = vld [vmem:[%s1043 + $0x1e8] sm:$0xff]
    %v1106 = vld [vmem:[%s1043 + $0x1f0] sm:$0xff]
    %v1107 = vld [vmem:[%s1043 + $0x1f8] sm:$0xff]
    %v1108 = vperm.slane %v91, 3
    %v1109 = vperm.slane %v92, 3
    %v1174 = vunpack.c.l.b16 %v1044
    %v1175 = vunpack.c.h.b16 %v1044
    %v1176 = vunpack.c.l.b16 %v1045
    %v1177 = vunpack.c.h.b16 %v1045
    %v1178 = vunpack.c.l.b16 %v1046
    %v1179 = vunpack.c.h.b16 %v1046
    %v1180 = vunpack.c.l.b16 %v1047
    %v1181 = vunpack.c.h.b16 %v1047
    %v1182 = vunpack.c.l.b16 %v1048
    %v1183 = vunpack.c.h.b16 %v1048
    %v1184 = vunpack.c.l.b16 %v1049
    %v1185 = vunpack.c.h.b16 %v1049
    %v1186 = vunpack.c.l.b16 %v1050
    %v1187 = vunpack.c.h.b16 %v1050
    %v1188 = vunpack.c.l.b16 %v1051
    %v1189 = vunpack.c.h.b16 %v1051
    %v1190 = vunpack.c.l.b16 %v1052
    %v1191 = vunpack.c.h.b16 %v1052
    %v1192 = vunpack.c.l.b16 %v1053
    %v1193 = vunpack.c.h.b16 %v1053
    %v1194 = vunpack.c.l.b16 %v1054
    %v1195 = vunpack.c.h.b16 %v1054
    %v1196 = vunpack.c.l.b16 %v1055
    %v1197 = vunpack.c.h.b16 %v1055
    %v1198 = vunpack.c.l.b16 %v1056
    %v1199 = vunpack.c.h.b16 %v1056
    %v1200 = vunpack.c.l.b16 %v1057
    %v1201 = vunpack.c.h.b16 %v1057
    %v1202 = vunpack.c.l.b16 %v1058
    %v1203 = vunpack.c.h.b16 %v1058
    %v1204 = vunpack.c.l.b16 %v1059
    %v1205 = vunpack.c.h.b16 %v1059
    %v1206 = vunpack.c.l.b16 %v1060
    %v1207 = vunpack.c.h.b16 %v1060
    %v1208 = vunpack.c.l.b16 %v1061
    %v1209 = vunpack.c.h.b16 %v1061
    %v1210 = vunpack.c.l.b16 %v1062
    %v1211 = vunpack.c.h.b16 %v1062
    %v1212 = vunpack.c.l.b16 %v1063
    %v1213 = vunpack.c.h.b16 %v1063
    %v1214 = vunpack.c.l.b16 %v1064
    %v1215 = vunpack.c.h.b16 %v1064
    %v1216 = vunpack.c.l.b16 %v1065
    %v1217 = vunpack.c.h.b16 %v1065
    %v1218 = vunpack.c.l.b16 %v1066
    %v1219 = vunpack.c.h.b16 %v1066
    %v1220 = vunpack.c.l.b16 %v1067
    %v1221 = vunpack.c.h.b16 %v1067
    %v1222 = vunpack.c.l.b16 %v1068
    %v1223 = vunpack.c.h.b16 %v1068
    %v1224 = vunpack.c.l.b16 %v1069
    %v1225 = vunpack.c.h.b16 %v1069
    %v1226 = vunpack.c.l.b16 %v1070
    %v1227 = vunpack.c.h.b16 %v1070
    %v1228 = vunpack.c.l.b16 %v1071
    %v1229 = vunpack.c.h.b16 %v1071
    %v1230 = vunpack.c.l.b16 %v1072
    %v1231 = vunpack.c.h.b16 %v1072
    %v1232 = vunpack.c.l.b16 %v1073
    %v1233 = vunpack.c.h.b16 %v1073
    %v1234 = vunpack.c.l.b16 %v1074
    %v1235 = vunpack.c.h.b16 %v1074
    %v1236 = vunpack.c.l.b16 %v1075
    %v1237 = vunpack.c.h.b16 %v1075
    %v1238 = vunpack.c.l.b16 %v1076
    %v1239 = vunpack.c.h.b16 %v1076
    %v1240 = vunpack.c.l.b16 %v1077
    %v1241 = vunpack.c.h.b16 %v1077
    %v1242 = vunpack.c.l.b16 %v1078
    %v1243 = vunpack.c.h.b16 %v1078
    %v1244 = vunpack.c.l.b16 %v1079
    %v1245 = vunpack.c.h.b16 %v1079
    %v1246 = vunpack.c.l.b16 %v1080
    %v1247 = vunpack.c.h.b16 %v1080
    %v1248 = vunpack.c.l.b16 %v1081
    %v1249 = vunpack.c.h.b16 %v1081
    %v1250 = vunpack.c.l.b16 %v1082
    %v1251 = vunpack.c.h.b16 %v1082
    %v1252 = vunpack.c.l.b16 %v1083
    %v1253 = vunpack.c.h.b16 %v1083
    %v1254 = vunpack.c.l.b16 %v1084
    %v1255 = vunpack.c.h.b16 %v1084
    %v1256 = vunpack.c.l.b16 %v1085
    %v1257 = vunpack.c.h.b16 %v1085
    %v1258 = vunpack.c.l.b16 %v1086
    %v1259 = vunpack.c.h.b16 %v1086
    %v1260 = vunpack.c.l.b16 %v1087
    %v1261 = vunpack.c.h.b16 %v1087
    %v1262 = vunpack.c.l.b16 %v1088
    %v1263 = vunpack.c.h.b16 %v1088
    %v1264 = vunpack.c.l.b16 %v1089
    %v1265 = vunpack.c.h.b16 %v1089
    %v1266 = vunpack.c.l.b16 %v1090
    %v1267 = vunpack.c.h.b16 %v1090
    %v1268 = vunpack.c.l.b16 %v1091
    %v1269 = vunpack.c.h.b16 %v1091
    %v1270 = vunpack.c.l.b16 %v1092
    %v1271 = vunpack.c.h.b16 %v1092
    %v1272 = vunpack.c.l.b16 %v1093
    %v1273 = vunpack.c.h.b16 %v1093
    %v1274 = vunpack.c.l.b16 %v1094
    %v1275 = vunpack.c.h.b16 %v1094
    %v1276 = vunpack.c.l.b16 %v1095
    %v1277 = vunpack.c.h.b16 %v1095
    %v1278 = vunpack.c.l.b16 %v1096
    %v1279 = vunpack.c.h.b16 %v1096
    %v1280 = vunpack.c.l.b16 %v1097
    %v1281 = vunpack.c.h.b16 %v1097
    %v1282 = vunpack.c.l.b16 %v1098
    %v1283 = vunpack.c.h.b16 %v1098
    %v1284 = vunpack.c.l.b16 %v1099
    %v1285 = vunpack.c.h.b16 %v1099
    %v1286 = vunpack.c.l.b16 %v1100
    %v1287 = vunpack.c.h.b16 %v1100
    %v1288 = vunpack.c.l.b16 %v1101
    %v1289 = vunpack.c.h.b16 %v1101
    %v1290 = vunpack.c.l.b16 %v1102
    %v1291 = vunpack.c.h.b16 %v1102
    %v1292 = vunpack.c.l.b16 %v1103
    %v1293 = vunpack.c.h.b16 %v1103
    %v1294 = vunpack.c.l.b16 %v1104
    %v1295 = vunpack.c.h.b16 %v1104
    %v1296 = vunpack.c.l.b16 %v1105
    %v1297 = vunpack.c.h.b16 %v1105
    %v1298 = vunpack.c.l.b16 %v1106
    %v1299 = vunpack.c.h.b16 %v1106
    %v1300 = vunpack.c.l.b16 %v1107
    %v1301 = vunpack.c.h.b16 %v1107
    %v1302 = vpack.c.b16 %v1176, %v1174
    %v1303 = vpack.c.b16 %v1177, %v1175
    %v1304 = vpack.c.b16 %v1180, %v1178
    %v1305 = vpack.c.b16 %v1181, %v1179
    %v1306 = vpack.c.b16 %v1184, %v1182
    %v1307 = vpack.c.b16 %v1185, %v1183
    %v1308 = vpack.c.b16 %v1188, %v1186
    %v1309 = vpack.c.b16 %v1189, %v1187
    %v1310 = vpack.c.b16 %v1192, %v1190
    %v1311 = vpack.c.b16 %v1193, %v1191
    %v1312 = vpack.c.b16 %v1196, %v1194
    %v1313 = vpack.c.b16 %v1197, %v1195
    %v1314 = vpack.c.b16 %v1200, %v1198
    %v1315 = vpack.c.b16 %v1201, %v1199
    %v1316 = vpack.c.b16 %v1204, %v1202
    %v1317 = vpack.c.b16 %v1205, %v1203
    %v1318 = vpack.c.b16 %v1208, %v1206
    %v1319 = vpack.c.b16 %v1209, %v1207
    %v1320 = vpack.c.b16 %v1212, %v1210
    %v1321 = vpack.c.b16 %v1213, %v1211
    %v1322 = vpack.c.b16 %v1216, %v1214
    %v1323 = vpack.c.b16 %v1217, %v1215
    %v1324 = vpack.c.b16 %v1220, %v1218
    %v1325 = vpack.c.b16 %v1221, %v1219
    %v1326 = vpack.c.b16 %v1224, %v1222
    %v1327 = vpack.c.b16 %v1225, %v1223
    %v1328 = vpack.c.b16 %v1228, %v1226
    %v1329 = vpack.c.b16 %v1229, %v1227
    %v1330 = vpack.c.b16 %v1232, %v1230
    %v1331 = vpack.c.b16 %v1233, %v1231
    %v1332 = vpack.c.b16 %v1236, %v1234
    %v1333 = vpack.c.b16 %v1237, %v1235
    %v1334 = vpack.c.b16 %v1240, %v1238
    %v1335 = vpack.c.b16 %v1241, %v1239
    %v1336 = vpack.c.b16 %v1244, %v1242
    %v1337 = vpack.c.b16 %v1245, %v1243
    %v1338 = vpack.c.b16 %v1248, %v1246
    %v1339 = vpack.c.b16 %v1249, %v1247
    %v1340 = vpack.c.b16 %v1252, %v1250
    %v1341 = vpack.c.b16 %v1253, %v1251
    %v1342 = vpack.c.b16 %v1256, %v1254
    %v1343 = vpack.c.b16 %v1257, %v1255
    %v1344 = vpack.c.b16 %v1260, %v1258
    %v1345 = vpack.c.b16 %v1261, %v1259
    %v1346 = vpack.c.b16 %v1264, %v1262
    %v1347 = vpack.c.b16 %v1265, %v1263
    %v1348 = vpack.c.b16 %v1268, %v1266
    %v1349 = vpack.c.b16 %v1269, %v1267
    %v1350 = vpack.c.b16 %v1272, %v1270
    %v1351 = vpack.c.b16 %v1273, %v1271
    %v1352 = vpack.c.b16 %v1276, %v1274
    %v1353 = vpack.c.b16 %v1277, %v1275
    %v1354 = vpack.c.b16 %v1280, %v1278
    %v1355 = vpack.c.b16 %v1281, %v1279
    %v1356 = vpack.c.b16 %v1284, %v1282
    %v1357 = vpack.c.b16 %v1285, %v1283
    %v1358 = vpack.c.b16 %v1288, %v1286
    %v1359 = vpack.c.b16 %v1289, %v1287
    %v1360 = vpack.c.b16 %v1292, %v1290
    %v1361 = vpack.c.b16 %v1293, %v1291
    %v1362 = vpack.c.b16 %v1296, %v1294
    %v1363 = vpack.c.b16 %v1297, %v1295
    %v1364 = vpack.c.b16 %v1300, %v1298
    %v1365 = vpack.c.b16 %v1301, %v1299
    %1430 = vmatpush.bf16.msra.mxu0 %v1316
    %1431 = vmatpush.bf16.msra.mxu0 %v1314
    %1432 = vmatpush.bf16.msra.mxu0 %v1312
    %1433 = vmatpush.bf16.msra.mxu0 %v1310
    %1434 = vmatpush.bf16.msra.mxu0 %v1308
    %1435 = vmatpush.bf16.msra.mxu0 %v1306
    %1436 = vmatpush.bf16.msra.mxu0 %v1304
    %1437 = vmatpush.bf16.msra.mxu0 %v1302
    %1438 = vmatmul.bf16.gmra.mxu0 %v1039
    %v1439 = vpop.f32.mrf.mxu0
    %v1440 = vadd.f32 %v1108, %v1439
    %v1441 = vpop.f32.mrf.mxu0
    %1442 = vdwg.mxu0
    %1443 = vmatpush.bf16.msra.mxu0 %v1332
    %1444 = vmatpush.bf16.msra.mxu0 %v1330
    %1445 = vmatpush.bf16.msra.mxu0 %v1328
    %1446 = vmatpush.bf16.msra.mxu0 %v1326
    %1447 = vmatpush.bf16.msra.mxu0 %v1324
    %1448 = vmatpush.bf16.msra.mxu0 %v1322
    %1449 = vmatpush.bf16.msra.mxu0 %v1320
    %1450 = vmatpush.bf16.msra.mxu0 %v1318
    %1451 = vmatmul.bf16.gmra.mxu0 %v1040
    %v1452 = vpop.f32.mrf.mxu0
    %v1453 = vadd.f32 %v1440, %v1452
    %v1454 = vpop.f32.mrf.mxu0
    %1455 = vdwg.mxu0
    %1456 = vmatpush.bf16.msra.mxu0 %v1348
    %1457 = vmatpush.bf16.msra.mxu0 %v1346
    %1458 = vmatpush.bf16.msra.mxu0 %v1344
    %1459 = vmatpush.bf16.msra.mxu0 %v1342
    %1460 = vmatpush.bf16.msra.mxu0 %v1340
    %1461 = vmatpush.bf16.msra.mxu0 %v1338
    %1462 = vmatpush.bf16.msra.mxu0 %v1336
    %1463 = vmatpush.bf16.msra.mxu0 %v1334
    %1464 = vmatmul.bf16.gmra.mxu0 %v1041
    %v1465 = vpop.f32.mrf.mxu0
    %v1466 = vadd.f32 %v1453, %v1465
    %v1467 = vpop.f32.mrf.mxu0
    %1468 = vdwg.mxu0
    %1469 = vmatpush.bf16.msra.mxu0 %v1364
    %1470 = vmatpush.bf16.msra.mxu0 %v1362
    %1471 = vmatpush.bf16.msra.mxu0 %v1360
    %1472 = vmatpush.bf16.msra.mxu0 %v1358
    %1473 = vmatpush.bf16.msra.mxu0 %v1356
    %1474 = vmatpush.bf16.msra.mxu0 %v1354
    %1475 = vmatpush.bf16.msra.mxu0 %v1352
    %1476 = vmatpush.bf16.msra.mxu0 %v1350
    %1477 = vmatmul.bf16.gmra.mxu0 %v1042
    %v1478 = vpop.f32.mrf.mxu0
    %v1479 = vadd.f32 %v1466, %v1478
    %v1480 = vpop.f32.mrf.mxu0
    %1481 = vdwg.mxu0
    %1482 = vmatpush.bf16.msra.mxu0 %v1317
    %1483 = vmatpush.bf16.msra.mxu0 %v1315
    %1484 = vmatpush.bf16.msra.mxu0 %v1313
    %1485 = vmatpush.bf16.msra.mxu0 %v1311
    %1486 = vmatpush.bf16.msra.mxu0 %v1309
    %1487 = vmatpush.bf16.msra.mxu0 %v1307
    %1488 = vmatpush.bf16.msra.mxu0 %v1305
    %1489 = vmatpush.bf16.msra.mxu0 %v1303
    %1490 = vmatmul.bf16.gmra.mxu0 %v1039
    %v1491 = vpop.f32.mrf.mxu0
    %v1492 = vadd.f32 %v1109, %v1491
    %v1493 = vpop.f32.mrf.mxu0
    %1494 = vdwg.mxu0
    %1495 = vmatpush.bf16.msra.mxu0 %v1333
    %1496 = vmatpush.bf16.msra.mxu0 %v1331
    %1497 = vmatpush.bf16.msra.mxu0 %v1329
    %1498 = vmatpush.bf16.msra.mxu0 %v1327
    %1499 = vmatpush.bf16.msra.mxu0 %v1325
    %1500 = vmatpush.bf16.msra.mxu0 %v1323
    %1501 = vmatpush.bf16.msra.mxu0 %v1321
    %1502 = vmatpush.bf16.msra.mxu0 %v1319
    %1503 = vmatmul.bf16.gmra.mxu0 %v1040
    %v1504 = vpop.f32.mrf.mxu0
    %v1505 = vadd.f32 %v1492, %v1504
    %v1506 = vpop.f32.mrf.mxu0
    %1507 = vdwg.mxu0
    %1508 = vmatpush.bf16.msra.mxu0 %v1349
    %1509 = vmatpush.bf16.msra.mxu0 %v1347
    %1510 = vmatpush.bf16.msra.mxu0 %v1345
    %1511 = vmatpush.bf16.msra.mxu0 %v1343
    %1512 = vmatpush.bf16.msra.mxu0 %v1341
    %1513 = vmatpush.bf16.msra.mxu0 %v1339
    %1514 = vmatpush.bf16.msra.mxu0 %v1337
    %1515 = vmatpush.bf16.msra.mxu0 %v1335
    %1516 = vmatmul.bf16.gmra.mxu0 %v1041
    %v1517 = vpop.f32.mrf.mxu0
    %v1518 = vadd.f32 %v1505, %v1517
    %v1519 = vpop.f32.mrf.mxu0
    %1520 = vdwg.mxu0
    %1521 = vmatpush.bf16.msra.mxu0 %v1365
    %1522 = vmatpush.bf16.msra.mxu0 %v1363
    %1523 = vmatpush.bf16.msra.mxu0 %v1361
    %1524 = vmatpush.bf16.msra.mxu0 %v1359
    %1525 = vmatpush.bf16.msra.mxu0 %v1357
    %1526 = vmatpush.bf16.msra.mxu0 %v1355
    %1527 = vmatpush.bf16.msra.mxu0 %v1353
    %1528 = vmatpush.bf16.msra.mxu0 %v1351
    %1529 = vmatmul.bf16.gmra.mxu0 %v1042
    %v1530 = vpop.f32.mrf.mxu0
    %v1531 = vadd.f32 %v1518, %v1530
    %v1532 = vpop.f32.mrf.mxu0
    %1533 = vdwg.mxu0
    %v1534 = vadd.f32 %v1479, %v1531
    %1535 = vadd.xlane.f32.xlu0 %v1534
    %v1536 = vpop.xlane.xlu0 %1535
    %v1537 = vmul.f32 %v1536, %v999
    %v1538 = vmul.f32 %v1479, %v1479
    %v1539 = vmul.f32 %v1531, %v1531
    %v1540 = vadd.f32 %v1538, %v1539
    %1541 = vadd.xlane.f32.xlu0 %v1540
    %v1542 = vpop.xlane.xlu0 %1541
    %v1543 = vmul.f32 %v1542, %v999
    %v1544 = vmul.f32 %v1537, %v1537
    %v1545 = vsub.f32 %v1543, %v1544
    %v1546 = vmax.f32 %v1545, 0.0
    %v1547 = vsub.f32 %v1479, %v1537
    %v1548 = vsub.f32 %v1531, %v1537
    %v1549 = vadd.f32 %v1546, 1e-05
    %v1550 = vrsqrt.pop %v1549
    %v1551 = vmul.f32 %v1550, %v1549
    %v1552 = vmul.f32 %v1551, %v1550
    %v1553 = vmul.f32 0.5, %v1552
    %v1554 = vsub.f32 1.5, %v1553
    %v1555 = vmul.f32 %v1550, %v1554
    %vm1556 = vweird.f32 %v1549
    %vm1557 = vweird.f32 %v1550
    %vm1558 = vmor %vm1556, %vm1557
    %v1559 = vsel %vm1558, %v1550, %v1555
    %v1560 = vmul.f32 %v1547, %v1559
    %v1561 = vmul.f32 %v1548, %v1559
    %v1562 = vperm.slane %v91, 4
    %v1563 = vperm.slane %v92, 4
    %v1564 = vmul.f32 %v1560, %v1562
    %v1565 = vmul.f32 %v1561, %v1563
    %v1566 = vperm.slane %v91, 5
    %v1567 = vperm.slane %v92, 5
    %v1568 = vadd.f32 %v1564, %v1566
    %v1569 = vadd.f32 %v1565, %v1567
    %vm1570 = vcmp.gt.f32.partialorder %v1568, 0.0
    %vm1571 = vcmp.gt.f32.partialorder %v1569, 0.0
    %v1572 = vmul.f32 %v1568, 0.2
    %v1573 = vmul.f32 %v1569, 0.2
    %v1574 = vsel %vm1570, %v1568, %v1572
    %v1575 = vsel %vm1571, %v1569, %v1573
    %v1576 = vpack.c.bf16 %v1037, %v1037
    %v1577 = vpack.c.bf16 %v1038, %v1038
    %v1578 = vld [vmem:[#allocation6] sm:$0xf]
    %v1579 = vld [vmem:[#allocation6 + $0x4] sm:$0xf]
    %v1580 = vld [vmem:[#allocation6 + $0x8] sm:$0xf]
    %v1581 = vld [vmem:[#allocation6 + $0xc] sm:$0xf]
    %v1582 = vld [vmem:[#allocation6 + $0x10] sm:$0xf]
    %v1583 = vld [vmem:[#allocation6 + $0x14] sm:$0xf]
    %v1584 = vld [vmem:[#allocation6 + $0x18] sm:$0xf]
    %v1585 = vld [vmem:[#allocation6 + $0x1c] sm:$0xf]
    %v1586 = vld [vmem:[#allocation6 + $0x20] sm:$0xf]
    %v1587 = vld [vmem:[#allocation6 + $0x24] sm:$0xf]
    %v1588 = vld [vmem:[#allocation6 + $0x28] sm:$0xf]
    %v1589 = vld [vmem:[#allocation6 + $0x2c] sm:$0xf]
    %v1590 = vld [vmem:[#allocation6 + $0x30] sm:$0xf]
    %v1591 = vld [vmem:[#allocation6 + $0x34] sm:$0xf]
    %v1592 = vld [vmem:[#allocation6 + $0x38] sm:$0xf]
    %v1593 = vld [vmem:[#allocation6 + $0x3c] sm:$0xf]
    %v1594 = vld [vmem:[#allocation6 + $0x40] sm:$0xf]
    %v1595 = vld [vmem:[#allocation6 + $0x44] sm:$0xf]
    %v1596 = vld [vmem:[#allocation6 + $0x48] sm:$0xf]
    %v1597 = vld [vmem:[#allocation6 + $0x4c] sm:$0xf]
    %v1598 = vld [vmem:[#allocation6 + $0x50] sm:$0xf]
    %v1599 = vld [vmem:[#allocation6 + $0x54] sm:$0xf]
    %v1600 = vld [vmem:[#allocation6 + $0x58] sm:$0xf]
    %v1601 = vld [vmem:[#allocation6 + $0x5c] sm:$0xf]
    %v1602 = vld [vmem:[#allocation6 + $0x60] sm:$0xf]
    %v1603 = vld [vmem:[#allocation6 + $0x64] sm:$0xf]
    %v1604 = vld [vmem:[#allocation6 + $0x68] sm:$0xf]
    %v1605 = vld [vmem:[#allocation6 + $0x6c] sm:$0xf]
    %v1606 = vld [vmem:[#allocation6 + $0x70] sm:$0xf]
    %v1607 = vld [vmem:[#allocation6 + $0x74] sm:$0xf]
    %v1608 = vld [vmem:[#allocation6 + $0x78] sm:$0xf]
    %v1609 = vld [vmem:[#allocation6 + $0x7c] sm:$0xf]
    %v1610 = vperm.slane %v91, 7
    %v1643 = vunpack.c.l.b16 %v1578
    %v1644 = vunpack.c.l.b16 %v1579
    %v1645 = vunpack.c.l.b16 %v1580
    %v1646 = vunpack.c.l.b16 %v1581
    %v1647 = vunpack.c.l.b16 %v1582
    %v1648 = vunpack.c.l.b16 %v1583
    %v1649 = vunpack.c.l.b16 %v1584
    %v1650 = vunpack.c.l.b16 %v1585
    %v1651 = vunpack.c.l.b16 %v1586
    %v1652 = vunpack.c.l.b16 %v1587
    %v1653 = vunpack.c.l.b16 %v1588
    %v1654 = vunpack.c.l.b16 %v1589
    %v1655 = vunpack.c.l.b16 %v1590
    %v1656 = vunpack.c.l.b16 %v1591
    %v1657 = vunpack.c.l.b16 %v1592
    %v1658 = vunpack.c.l.b16 %v1593
    %v1659 = vunpack.c.l.b16 %v1594
    %v1660 = vunpack.c.l.b16 %v1595
    %v1661 = vunpack.c.l.b16 %v1596
    %v1662 = vunpack.c.l.b16 %v1597
    %v1663 = vunpack.c.l.b16 %v1598
    %v1664 = vunpack.c.l.b16 %v1599
    %v1665 = vunpack.c.l.b16 %v1600
    %v1666 = vunpack.c.l.b16 %v1601
    %v1667 = vunpack.c.l.b16 %v1602
    %v1668 = vunpack.c.l.b16 %v1603
    %v1669 = vunpack.c.l.b16 %v1604
    %v1670 = vunpack.c.l.b16 %v1605
    %v1671 = vunpack.c.l.b16 %v1606
    %v1672 = vunpack.c.l.b16 %v1607
    %v1673 = vunpack.c.l.b16 %v1608
    %v1674 = vunpack.c.l.b16 %v1609
    %v1675 = vpack.c.b16 %v1644, %v1643
    %v1676 = vpack.c.b16 %v1646, %v1645
    %v1677 = vpack.c.b16 %v1648, %v1647
    %v1678 = vpack.c.b16 %v1650, %v1649
    %v1679 = vpack.c.b16 %v1652, %v1651
    %v1680 = vpack.c.b16 %v1654, %v1653
    %v1681 = vpack.c.b16 %v1656, %v1655
    %v1682 = vpack.c.b16 %v1658, %v1657
    %v1683 = vpack.c.b16 %v1660, %v1659
    %v1684 = vpack.c.b16 %v1662, %v1661
    %v1685 = vpack.c.b16 %v1664, %v1663
    %v1686 = vpack.c.b16 %v1666, %v1665
    %v1687 = vpack.c.b16 %v1668, %v1667
    %v1688 = vpack.c.b16 %v1670, %v1669
    %v1689 = vpack.c.b16 %v1672, %v1671
    %v1690 = vpack.c.b16 %v1674, %v1673
    %1707 = vmatpush.bf16.msra.mxu0 %v1682
    %1708 = vmatpush.bf16.msra.mxu0 %v1681
    %1709 = vmatpush.bf16.msra.mxu0 %v1680
    %1710 = vmatpush.bf16.msra.mxu0 %v1679
    %1711 = vmatpush.bf16.msra.mxu0 %v1678
    %1712 = vmatpush.bf16.msra.mxu0 %v1677
    %1713 = vmatpush.bf16.msra.mxu0 %v1676
    %1714 = vmatpush.bf16.msra.mxu0 %v1675
    %1715 = vmatmul.bf16.gmra.mxu0 %v1576
    %v1716 = vpop.f32.mrf.mxu0
    %v1717 = vadd.f32 %v1610, %v1716
    %v1718 = vpop.f32.mrf.mxu0
    %1719 = vdwg.mxu0
    %1720 = vmatpush.bf16.msra.mxu0 %v1690
    %1721 = vmatpush.bf16.msra.mxu0 %v1689
    %1722 = vmatpush.bf16.msra.mxu0 %v1688
    %1723 = vmatpush.bf16.msra.mxu0 %v1687
    %1724 = vmatpush.bf16.msra.mxu0 %v1686
    %1725 = vmatpush.bf16.msra.mxu0 %v1685
    %1726 = vmatpush.bf16.msra.mxu0 %v1684
    %1727 = vmatpush.bf16.msra.mxu0 %v1683
    %1728 = vmatmul.bf16.gmra.mxu0 %v1577
    %v1729 = vpop.f32.mrf.mxu0
    %v1730 = vadd.f32 %v1717, %v1729
    %v1731 = vpop.f32.mrf.mxu0
    %1732 = vdwg.mxu0
    %v1733 = vperm.slane %v91, 6
    %v1734 = vperm.slane %v92, 6
    %v1735 = vmul.f32 %v1574, %v1733
    %v1736 = vmul.f32 %v1575, %v1734
    %v1737 = vadd.f32 %v1735, %v1736
    %1738 = vadd.xlane.f32.xlu0 %v1737
    %v1739 = vpop.xlane.xlu0 %1738
    %v1740 = vlaneseq
    %v1741 = vand.u32 %v1740, 127
    %vm1742 = vcmp.eq.s32.totalorder %v1741, 80
    %v1743 = vsel %vm1742, %v1739, 0.0
    %v1744 = vadd.f32 %v1730, %v1743
    %1745 = vst [vmem:[%s6] sm:$0xff] %v1744
    // Predicated region
    $region42: #{manager_policy_forward.1} parent=1 // pred_check
      _
    $region43: #{manager_policy_forward.1} parent=1 // pred_check_branch
      %1747 = sbr.rel (0) target = $region45
    $region44: #{manager_policy_forward.1} parent=1 // pred_region
      _
    $region45: #{manager_policy_forward.1} parent=1 // pred_fallthru
      _
    // Predicated region
    $region46: #{manager_policy_forward.1} parent=1 // pred_check
      _
    $region47: #{manager_policy_forward.1} parent=1 // pred_check_branch
      %1749 = sbr.rel (0) target = $region49
    $region48: #{manager_policy_forward.1} parent=1 // pred_region
      _
    $region49: #{manager_policy_forward.1} parent=1 // pred_fallthru
      _
    %1750 = vsyncpa [#allocation3], 1
    %1751 = vsyncpa [#allocation5], 1
    %1752 = vsyncpa [#allocation8], 1

</llo_original>
